<compile_context>
chip_gen: v5e
topology: v5e:2x2
jax: 0.10.0
libtpu: 0.0.40
codegen_flags: <defaults>
</compile_context>

<pallas_src>
import functools
import math

import jax
import jax.numpy as jnp
from jax.experimental import pallas as pl
from jax.experimental.pallas import tpu as pltpu

DTYPE = jnp.bfloat16          # MXU-native compute dtype
EPS = 1e-6
_MASK_NEG = -1e30             # finite "-inf": NaN-free online softmax for all-masked rows


def _tpu_vmem_bytes():
    try:
        return int(pltpu.get_tpu_info().vmem_capacity_bytes)
    except Exception:
        return 64 * 1024 * 1024            # conservative (v7x per-core VMEM)


_VMEM_BYTES = _tpu_vmem_bytes()
_VMEM_LIMIT = min(_VMEM_BYTES * 3 // 4, 96 * 1024 * 1024)
# Bigger MLP hidden-dim tile on 128 MiB parts (v5e/v6e); smaller on v7x (64 MiB).
_TF_PREF = 512 if _VMEM_BYTES >= 96 * 1024 * 1024 else 256


def _pick(n, pref, align):
    """Largest power-of-two tile <= pref that divides n and is a multiple of
    `align` (128 for lane dims, 8 for sublane dims); otherwise fall back to the
    full dimension, which is always layout-legal.  Never returns a non-dividing
    partial block (the old _pick hazard)."""
    t = pref
    while t >= align:
        if n % t == 0:
            return t
        t //= 2
    return n


# ----------------------- Kernel A: fused RMSNorm + matmul -----------------------
# rmsnorm(x) is computed ONCE per row-block into VMEM scratch (@pl.when(j == 0))
# and reused for every output-column tile j; the inner loop is purely MXU/DMA.
# The j axis is marked "arbitrary" because the xn scratch is resident across it.

def _norm_matmul_kernel(x_ref, g_ref, w_ref, o_ref, xn_ref, *, eps):
    @pl.when(pl.program_id(1) == 0)
    def _():
        x = x_ref[...].astype(jnp.float32)
        var = jnp.mean(x * x, axis=-1, keepdims=True)
        xn_ref[...] = (x * jax.lax.rsqrt(var + eps)
                       * g_ref[...].astype(jnp.float32)).astype(xn_ref.dtype)

    o_ref[...] = jnp.dot(xn_ref[...], w_ref[...],
                         preferred_element_type=jnp.float32).astype(o_ref.dtype)


def fused_rmsnorm_matmul(x2d, gamma, w, *, out_dtype=DTYPE, tm=256, tn=512, eps=EPS):
    """x2d: [M, D], gamma: [D], w: [D, N] -> rmsnorm(x2d) @ w  [M, N]."""
    M, D = x2d.shape
    D2, N = w.shape
    assert D == D2
    tm = _pick(M, tm, 8)
    tn = _pick(N, tn, 128)
    return pl.pallas_call(
        functools.partial(_norm_matmul_kernel, eps=eps),
        out_shape=jax.ShapeDtypeStruct((M, N), out_dtype),
        grid=(M // tm, N // tn),
        in_specs=[
            pl.BlockSpec((tm, D), lambda i, j: (i, 0)),
            pl.BlockSpec((1, D), lambda i, j: (0, 0)),
            pl.BlockSpec((D, tn), lambda i, j: (0, j)),
        ],
        out_specs=pl.BlockSpec((tm, tn), lambda i, j: (i, j)),
        scratch_shapes=[pltpu.VMEM((tm, D), w.dtype)],        # normalized rows (bf16)
        compiler_params=pltpu.CompilerParams(
            dimension_semantics=("parallel", "arbitrary"),
            vmem_limit_bytes=_VMEM_LIMIT),
    )(x2d, gamma.reshape(1, D), w)


# -------------- Kernel B: tiled matmul + fused residual (K accumulator) --------------

def _matmul_residual_kernel(x_ref, w_ref, r_ref, o_ref, acc_ref):
    k = pl.program_id(2)

    @pl.when(k == 0)
    def _():
        acc_ref[...] = jnp.zeros_like(acc_ref)

    acc_ref[...] += jnp.dot(x_ref[...], w_ref[...],
                            preferred_element_type=jnp.float32)

    @pl.when(k == pl.num_programs(2) - 1)
    def _():
        o_ref[...] = (acc_ref[...] + r_ref[...].astype(jnp.float32)).astype(o_ref.dtype)


def pallas_matmul_residual(x, w, resid, *, tm=256, tn=512, tk=1024):
    """residual + x @ w.  x: [M, K], w: [K, N], resid: [M, N] -> [M, N]."""
    M, K = x.shape
    K2, N = w.shape
    assert K == K2 and resid.shape == (M, N)
    tm = _pick(M, tm, 8)
    tn = _pick(N, tn, 128)
    tk = _pick(K, tk, 128)
    return pl.pallas_call(
        _matmul_residual_kernel,
        out_shape=jax.ShapeDtypeStruct((M, N), resid.dtype),
        grid=(M // tm, N // tn, K // tk),
        in_specs=[
            pl.BlockSpec((tm, tk), lambda i, j, k: (i, k)),
            pl.BlockSpec((tk, tn), lambda i, j, k: (k, j)),
            pl.BlockSpec((tm, tn), lambda i, j, k: (i, j)),
        ],
        out_specs=pl.BlockSpec((tm, tn), lambda i, j, k: (i, j)),
        scratch_shapes=[pltpu.VMEM((tm, tn), jnp.float32)],
        compiler_params=pltpu.CompilerParams(
            dimension_semantics=("parallel", "parallel", "arbitrary"),
            vmem_limit_bytes=_VMEM_LIMIT),
    )(x, w, resid)


# --------- Kernel C: fused RMSNorm + SwiGLU MLP + residual, tiled over F ---------
# acc[i] = sum_f silu(xn @ wg[:, f]) * (xn @ wu[:, f]) @ wd[f, :];  out = x + acc.

def _norm_mlp_kernel(x_ref, g_ref, wg_ref, wu_ref, wd_ref, o_ref,
                     xn_ref, acc_ref, *, eps):
    f = pl.program_id(1)

    @pl.when(f == 0)
    def _():
        x = x_ref[...].astype(jnp.float32)
        var = jnp.mean(x * x, axis=-1, keepdims=True)
        xn_ref[...] = (x * jax.lax.rsqrt(var + eps)
                       * g_ref[...].astype(jnp.float32)).astype(xn_ref.dtype)
        acc_ref[...] = jnp.zeros_like(acc_ref)

    xn = xn_ref[...]
    g = jnp.dot(xn, wg_ref[...], preferred_element_type=jnp.float32)
    u = jnp.dot(xn, wu_ref[...], preferred_element_type=jnp.float32)
    hblk = (jax.nn.silu(g) * u).astype(wd_ref.dtype)
    acc_ref[...] += jnp.dot(hblk, wd_ref[...], preferred_element_type=jnp.float32)

    @pl.when(f == pl.num_programs(1) - 1)
    def _():
        o_ref[...] = (acc_ref[...] + x_ref[...].astype(jnp.float32)).astype(o_ref.dtype)


def fused_rmsnorm_mlp_residual(x2d, gamma, wg, wu, wd, *, tm=256, tf=None, eps=EPS):
    """x2d: [M, D] -> x2d + down(silu(gate(rmsnorm(x2d))) * up(rmsnorm(x2d)))."""
    M, D = x2d.shape
    D2, F = wg.shape
    assert D == D2 and wu.shape == (D, F) and wd.shape == (F, D)
    tm = _pick(M, tm, 8)
    tf = _pick(F, _TF_PREF if tf is None else tf, 128)
    return pl.pallas_call(
        functools.partial(_norm_mlp_kernel, eps=eps),
        out_shape=jax.ShapeDtypeStruct((M, D), x2d.dtype),
        grid=(M // tm, F // tf),
        in_specs=[
            pl.BlockSpec((tm, D), lambda i, f: (i, 0)),
            pl.BlockSpec((1, D), lambda i, f: (0, 0)),
            pl.BlockSpec((D, tf), lambda i, f: (0, f)),
            pl.BlockSpec((D, tf), lambda i, f: (0, f)),
            pl.BlockSpec((tf, D), lambda i, f: (f, 0)),
        ],
        out_specs=pl.BlockSpec((tm, D), lambda i, f: (i, 0)),
        scratch_shapes=[
            pltpu.VMEM((tm, D), x2d.dtype),       # normalized activations (bf16)
            pltpu.VMEM((tm, D), jnp.float32),     # down-proj accumulator
        ],
        compiler_params=pltpu.CompilerParams(
            dimension_semantics=("parallel", "arbitrary"),
            vmem_limit_bytes=_VMEM_LIMIT),
    )(x2d, gamma.reshape(1, D), wg, wu, wd)


# --------------------- Kernel D: flash attention (online softmax) ---------------------
# grid = (B, H/hb, S/tq, S/tk): head-blocks and q-tiles are parallel (megacore can
# shard even at B=1); the kv axis is the "arbitrary" reduction carrying m/l/acc
# scratch.  The binary bf16 mask tile is converted to an additive f32 bias in-kernel.

def _flash_attn_kernel(q_ref, k_ref, v_ref, m_ref, o_ref,
                       m_sc, l_sc, acc_sc, *, scale):
    kv = pl.program_id(3)

    @pl.when(kv == 0)
    def _():
        m_sc[...] = jnp.full_like(m_sc, -jnp.inf)
        l_sc[...] = jnp.zeros_like(l_sc)
        acc_sc[...] = jnp.zeros_like(acc_sc)

    q = q_ref[0]                                   # [hb, tq, Dh] bf16
    k = k_ref[0]                                   # [hb, tk, Dh]
    v = v_ref[0]
    s = jnp.einsum("hqd,hkd->hqk", q, k,
                   preferred_element_type=jnp.float32) * scale
    bias = jnp.where(m_ref[0] > 0, jnp.float32(0.0), jnp.float32(_MASK_NEG))
    s = s + bias[None, :, :]

    m_prev = m_sc[...]                             # [hb, tq, 1]
    m_new = jnp.maximum(m_prev, jnp.max(s, axis=-1, keepdims=True))
    alpha = jnp.exp(m_prev - m_new)
    p = jnp.exp(s - m_new)
    l_sc[...] = alpha * l_sc[...] + jnp.sum(p, axis=-1, keepdims=True)
    acc_sc[...] = alpha * acc_sc[...] + jnp.einsum(
        "hqk,hkd->hqd", p.astype(v.dtype), v, preferred_element_type=jnp.float32)
    m_sc[...] = m_new

    @pl.when(kv == pl.num_programs(3) - 1)
    def _():
        o_ref[0] = (acc_sc[...] *
                    pl.reciprocal(l_sc[...], approx=True)).astype(o_ref.dtype)


def pallas_flash_attention(q, k, v, mask_b, scale, *, hb=8, tq=128, tk=256):
    """q,k,v: [B, H, S, Dh] bf16, mask_b: [B, S, S] bf16 {0,1} -> [B, H, S, Dh]."""
    B, H, S, Dh = q.shape
    hb = _pick(H, hb, 1)
    tq = _pick(S, tq, 8)
    tk = _pick(S, tk, 128)
    return pl.pallas_call(
        functools.partial(_flash_attn_kernel, scale=scale),
        out_shape=jax.ShapeDtypeStruct((B, H, S, Dh), q.dtype),
        grid=(B, H // hb, S // tq, S // tk),
        in_specs=[
            pl.BlockSpec((1, hb, tq, Dh), lambda b, h, i, j: (b, h, i, 0)),
            pl.BlockSpec((1, hb, tk, Dh), lambda b, h, i, j: (b, h, j, 0)),
            pl.BlockSpec((1, hb, tk, Dh), lambda b, h, i, j: (b, h, j, 0)),
            pl.BlockSpec((1, tq, tk), lambda b, h, i, j: (b, i, j)),
        ],
        out_specs=pl.BlockSpec((1, hb, tq, Dh), lambda b, h, i, j: (b, h, i, 0)),
        scratch_shapes=[
            pltpu.VMEM((hb, tq, 1), jnp.float32),      # running max
            pltpu.VMEM((hb, tq, 1), jnp.float32),      # running denominator
            pltpu.VMEM((hb, tq, Dh), jnp.float32),     # output accumulator
        ],
        compiler_params=pltpu.CompilerParams(
            dimension_semantics=("parallel", "parallel", "parallel", "arbitrary"),
            vmem_limit_bytes=_VMEM_LIMIT),
    )(q, k, v, mask_b)


# --------------------------------- model glue ---------------------------------

def apply_rope(x, cos, sin):
    # x: [B, S, H, Dh] (bf16), cos/sin: [B, S, 1, Dh] (f32) -> f32
    half = x.shape[-1] // 2
    xr = jnp.concatenate([-x[..., half:], x[..., :half]], axis=-1)
    return x.astype(jnp.float32) * cos + xr.astype(jnp.float32) * sin


def create_rope_embed_ids(input_ids, pad_token_id):
    non_pad = (input_ids != pad_token_id).astype(jnp.int32)
    return jnp.maximum(jnp.cumsum(non_pad, axis=1) - 1, 0)


def init_params(key, cfg):
    D, H, Dh = cfg["dim"], cfg["n_heads"], cfg["head_dim"]
    F_ = cfg["hidden_dim"]
    V, G = cfg["vocab_size"], cfg["num_gist_tokens"]
    L = cfg["n_layers"]
    max_pos = cfg["max_pos"]

    def nrm(k, shape, scale=0.02):
        return (scale * jax.random.normal(k, shape)).astype(DTYPE)

    keys = jax.random.split(key, 2 + 5 * L)
    ki = iter(keys)

    params = {
        # embedding table grown by num_gist_tokens (gist vocab extension)
        "embed": nrm(next(ki), (V + G, D)),
        "lm_head": nrm(next(ki), (D, V)),      # NoInitLinear(dim, vocab), stored [in, out]
        "final_norm": jnp.ones((D,), DTYPE),
    }
    # per-layer weights stacked with a leading L axis so the layer loop is lax.scan
    layers = {"ln1": [], "ln2": [], "wqkv": [], "wo": [], "wg": [], "wu": [], "wd": []}
    for _ in range(L):
        layers["ln1"].append(jnp.ones((D,), DTYPE))
        layers["ln2"].append(jnp.ones((D,), DTYPE))
        # fused QKV weight: columns ordered (q | k | v), each (head, head_dim)
        layers["wqkv"].append(nrm(next(ki), (D, 3 * H * Dh)))
        layers["wo"].append(nrm(next(ki), (H * Dh, D)))
        layers["wg"].append(nrm(next(ki), (D, F_)))
        layers["wu"].append(nrm(next(ki), (D, F_)))
        layers["wd"].append(nrm(next(ki), (F_, D)))
    params["layers"] = {k: jnp.stack(v) for k, v in layers.items()}

    # RoPE caches (rotary_emb.cos_cached / sin_cached), kept in f32
    inv_freq = 1.0 / (10000.0 ** (jnp.arange(0, Dh, 2, dtype=jnp.float32) / Dh))
    t = jnp.arange(max_pos, dtype=jnp.float32)
    freqs = jnp.einsum("i,j->ij", t, inv_freq)
    emb = jnp.concatenate([freqs, freqs], axis=-1)
    params["cos_cached"] = jnp.cos(emb)
    params["sin_cached"] = jnp.sin(emb)
    return params


def llama_forward(params, input_ids, attention_mask, cfg):
    """input_ids: [B, S] int32, attention_mask: [B, S, S] {0,1} -> logits [B, S, vocab] (f32)."""
    B, S = input_ids.shape
    D, H, Dh = cfg["dim"], cfg["n_heads"], cfg["head_dim"]
    V = cfg["vocab_size"]

    # binary mask streamed to the attention kernel as bf16 (converted to the
    # additive soft mask *inside* the kernel — half the HBM bytes of f32)
    mask_b = attention_mask.astype(jnp.bfloat16)                        # [B, S, S]
    rope_ids = create_rope_embed_ids(input_ids, cfg["pad_token_id"])    # [B, S]
    cos = params["cos_cached"][rope_ids][:, :, None, :]                 # [B, S, 1, Dh] f32
    sin = params["sin_cached"][rope_ids][:, :, None, :]

    h = params["embed"][input_ids].astype(DTYPE)                        # [B, S, D]
    scale = 1.0 / math.sqrt(Dh)

    def layer_step(h, lw):
        h2d = h.reshape(B * S, D)

        # --- self attention block: ln1 fused into the single QKV GEMM ---
        qkv = fused_rmsnorm_matmul(h2d, lw["ln1"], lw["wqkv"])          # [B*S, 3*H*Dh]
        qkv = qkv.reshape(B, S, 3, H, Dh)
        q = apply_rope(qkv[:, :, 0], cos, sin).astype(DTYPE)            # [B, S, H, Dh]
        k = apply_rope(qkv[:, :, 1], cos, sin).astype(DTYPE)
        v = qkv[:, :, 2]
        q = q.transpose(0, 2, 1, 3)                                     # [B, H, S, Dh]
        k = k.transpose(0, 2, 1, 3)
        v = v.transpose(0, 2, 1, 3)
        attn = pallas_flash_attention(q, k, v, mask_b, scale)           # [B, H, S, Dh]
        attn2d = attn.transpose(0, 2, 1, 3).reshape(B * S, H * Dh)
        # wo projection with the residual add fused into the kernel
        h2d = pallas_matmul_residual(attn2d, lw["wo"], h2d)             # [B*S, D]

        # --- MLP block: ln2 + gate/up/down + residual in one kernel ---
        h2d = fused_rmsnorm_mlp_residual(h2d, lw["ln2"], lw["wg"], lw["wu"], lw["wd"])
        return h2d.reshape(B, S, D), None

    h, _ = jax.lax.scan(layer_step, h, params["layers"])

    # final RMSNorm fused into the lm_head GEMM; logits in f32
    logits = fused_rmsnorm_matmul(h.reshape(B * S, D), params["final_norm"],
                                  params["lm_head"], out_dtype=jnp.float32)
    return logits.reshape(B, S, V)


if __name__ == "__main__":
    cfg = dict(
        dim=32,
        n_heads=4,
        head_dim=8,
        hidden_dim=64,
        n_layers=2,
        vocab_size=64,
        num_gist_tokens=20,
        pad_token_id=0,
        max_pos=64,
    )

    key = jax.random.PRNGKey(0)
    kp, kid = jax.random.split(key)
    params = init_params(kp, cfg)

    B, S = 2, 8
    # token ids in [1, vocab + gist) so gist-extended embedding rows are exercised
    input_ids = jax.random.randint(
        kid, (B, S), 1, cfg["vocab_size"] + cfg["num_gist_tokens"], dtype=jnp.int32
    )
    # causal binary attention mask [B, S, S]
    attention_mask = jnp.broadcast_to(
        jnp.tril(jnp.ones((S, S), dtype=jnp.float32)), (B, S, S)
    )

    fwd = jax.jit(lambda p, ids, m: llama_forward(p, ids, m, cfg))
    logits = fwd(params, input_ids, attention_mask)
    logits = jax.block_until_ready(logits)
    assert logits.shape == (B, S, cfg["vocab_size"])
    assert bool(jnp.all(jnp.isfinite(logits)))
    print("KERNEL_OK")
</pallas_src>

<mosaic_0001>
module attributes {stable_mosaic.version = 11 : i64} {
  func.func @_norm_matmul_kernel(%arg0: i32, %arg1: i32, %arg2: memref<16x32xbf16, #tpu.memory_space<vmem>>, %arg3: memref<1x32xbf16, #tpu.memory_space<vmem>>, %arg4: memref<32x96xbf16, #tpu.memory_space<vmem>>, %arg5: memref<16x96xbf16, #tpu.memory_space<vmem>>, %arg6: memref<16x32xbf16, #tpu.memory_space<vmem>>) attributes {dimension_semantics = [#tpu.dimension_semantics<parallel>, #tpu.dimension_semantics<arbitrary>], iteration_bounds = array<i64: 1, 1>, scalar_prefetch = 0 : i64, scratch_operands = 1 : i64, tpu.core_type = #tpu.core_type<tc>, window_params = [{transform_indices = @transform_0, window_bounds = array<i64: 16, 32>}, {pipeline_mode = #tpu.pipeline_mode<synchronous>, transform_indices = @transform_1, window_bounds = array<i64: 1, 32>}, {transform_indices = @transform_2, window_bounds = array<i64: 32, 96>}, {transform_indices = @transform_3, window_bounds = array<i64: 16, 96>}]} {
    %c0_i32 = arith.constant 0 : i32
    %0 = arith.cmpi eq, %arg1, %c0_i32 : i32
    %1 = arith.extui %0 : i1 to i32
    %c0_i32_0 = arith.constant 0 : i32
    %2 = arith.cmpi ne, %1, %c0_i32_0 : i32
    scf.if %2 {
      %c0_6 = arith.constant 0 : index
      %c0_7 = arith.constant 0 : index
      %8 = vector.load %arg2[%c0_6, %c0_7] : memref<16x32xbf16, #tpu.memory_space<vmem>>, vector<16x32xbf16>
      %9 = arith.extf %8 : vector<16x32xbf16> to vector<16x32xf32>
      %10 = arith.mulf %9, %9 : vector<16x32xf32>
      %cst_8 = arith.constant dense<0.000000e+00> : vector<16xf32>
      %11 = vector.multi_reduction <add>, %10, %cst_8 [1] : vector<16x32xf32> to vector<16xf32>
      %12 = vector.shape_cast %11 : vector<16xf32> to vector<16x1xf32>
      %cst_9 = arith.constant 3.200000e+01 : f32
      %13 = vector.broadcast %cst_9 : f32 to vector<16x1xf32>
      %14 = arith.divf %12, %13 : vector<16x1xf32>
      %cst_10 = arith.constant 9.99999997E-7 : f32
      %15 = vector.broadcast %cst_10 : f32 to vector<16x1xf32>
      %16 = arith.addf %14, %15 : vector<16x1xf32>
      %17 = math.rsqrt %16 : vector<16x1xf32>
      %18 = vector.broadcast %17 : vector<16x1xf32> to vector<16x32xf32>
      %19 = arith.mulf %9, %18 : vector<16x32xf32>
      %c0_11 = arith.constant 0 : index
      %c0_12 = arith.constant 0 : index
      %20 = vector.load %arg3[%c0_11, %c0_12] : memref<1x32xbf16, #tpu.memory_space<vmem>>, vector<1x32xbf16>
      %21 = arith.extf %20 : vector<1x32xbf16> to vector<1x32xf32>
      %22 = vector.broadcast %21 : vector<1x32xf32> to vector<16x32xf32>
      %23 = arith.mulf %19, %22 : vector<16x32xf32>
      %24 = arith.truncf %23 : vector<16x32xf32> to vector<16x32xbf16>
      %c0_13 = arith.constant 0 : index
      %c0_14 = arith.constant 0 : index
      %25 = vector.load %arg6[%c0_13, %c0_14] : memref<16x32xbf16, #tpu.memory_space<vmem>>, vector<16x32xbf16>
      tpu.vector_store %arg6[%c0_13, %c0_14], %24 {strides = array<i32>} : memref<16x32xbf16, #tpu.memory_space<vmem>>, vector<16x32xbf16>,
    } else {
    }
    %c0 = arith.constant 0 : index
    %c0_1 = arith.constant 0 : index
    %3 = vector.load %arg6[%c0, %c0_1] : memref<16x32xbf16, #tpu.memory_space<vmem>>, vector<16x32xbf16>
    %c0_2 = arith.constant 0 : index
    %c0_3 = arith.constant 0 : index
    %4 = vector.load %arg4[%c0_2, %c0_3] : memref<32x96xbf16, #tpu.memory_space<vmem>>, vector<32x96xbf16>
    %cst = arith.constant dense<0.000000e+00> : vector<16x96xf32>
    %5 = tpu.matmul %3, %4, %cst {dimension_numbers = #tpu.dot_dimension_numbers<[1], [0], [0], [1], [0, 0, 1, 1], [], []>} : vector<16x32xbf16>, vector<32x96xbf16>, vector<16x96xf32> -> vector<16x96xf32>
    %6 = arith.truncf %5 : vector<16x96xf32> to vector<16x96xbf16>
    %c0_4 = arith.constant 0 : index
    %c0_5 = arith.constant 0 : index
    %7 = vector.load %arg5[%c0_4, %c0_5] : memref<16x96xbf16, #tpu.memory_space<vmem>>, vector<16x96xbf16>
    tpu.vector_store %arg5[%c0_4, %c0_5], %6 {strides = array<i32>} : memref<16x96xbf16, #tpu.memory_space<vmem>>, vector<16x96xbf16>,
    return
  }
  func.func @transform_0(%arg0: i32, %arg1: i32) -> (i32, i32) {
    %c0_i32 = arith.constant 0 : i32
    %c0_i32_0 = arith.constant 0 : i32
    return %arg0, %c0_i32 : i32, i32
  }
  func.func @transform_1(%arg0: i32, %arg1: i32) -> (i32, i32) {
    %c0_i32 = arith.constant 0 : i32
    %c0_i32_0 = arith.constant 0 : i32
    %c0_i32_1 = arith.constant 0 : i32
    return %c0_i32, %c0_i32_0 : i32, i32
  }
  func.func @transform_2(%arg0: i32, %arg1: i32) -> (i32, i32) {
    %c0_i32 = arith.constant 0 : i32
    %c0_i32_0 = arith.constant 0 : i32
    return %c0_i32, %arg1 : i32, i32
  }
  func.func @transform_3(%arg0: i32, %arg1: i32) -> (i32, i32) {
    %c0_i32 = arith.constant 0 : i32
    return %arg0, %arg1 : i32, i32
  }
}

module attributes {stable_mosaic.version = 11 : i64} {
  func.func @_flash_attn_kernel(%arg0: i32, %arg1: i32, %arg2: i32, %arg3: i32, %arg4: memref<1x4x8x8xbf16, #tpu.memory_space<vmem>>, %arg5: memref<1x4x8x8xbf16, #tpu.memory_space<vmem>>, %arg6: memref<1x4x8x8xbf16, #tpu.memory_space<vmem>>, %arg7: memref<1x8x8xbf16, #tpu.memory_space<vmem>>, %arg8: memref<1x4x8x8xbf16, #tpu.memory_space<vmem>>, %arg9: memref<4x8x1xf32, #tpu.memory_space<vmem>>, %arg10: memref<4x8x1xf32, #tpu.memory_space<vmem>>, %arg11: memref<4x8x8xf32, #tpu.memory_space<vmem>>) attributes {dimension_semantics = [#tpu.dimension_semantics<parallel>, #tpu.dimension_semantics<parallel>, #tpu.dimension_semantics<parallel>, #tpu.dimension_semantics<arbitrary>], iteration_bounds = array<i64: 2, 1, 1, 1>, scalar_prefetch = 0 : i64, scratch_operands = 3 : i64, tpu.core_type = #tpu.core_type<tc>, window_params = [{transform_indices = @transform_0, window_bounds = array<i64: 1, 4, 8, 8>}, {transform_indices = @transform_1, window_bounds = array<i64: 1, 4, 8, 8>}, {transform_indices = @transform_2, window_bounds = array<i64: 1, 4, 8, 8>}, {transform_indices = @transform_3, window_bounds = array<i64: 1, 8, 8>}, {transform_indices = @transform_4, window_bounds = array<i64: 1, 4, 8, 8>}]} {
    %c0_i32 = arith.constant 0 : i32
    %0 = arith.cmpi eq, %arg3, %c0_i32 : i32
    %1 = arith.extui %0 : i1 to i32
    %c0_i32_0 = arith.constant 0 : i32
    %2 = arith.cmpi ne, %1, %c0_i32_0 : i32
    scf.if %2 {
      %cst_42 = arith.constant 0xFF800000 : f32
      %48 = vector.broadcast %cst_42 : f32 to vector<4x8x1xf32>
      %c0_43 = arith.constant 0 : index
      %c0_44 = arith.constant 0 : index
      %c0_45 = arith.constant 0 : index
      %49 = vector.load %arg9[%c0_43, %c0_44, %c0_45] : memref<4x8x1xf32, #tpu.memory_space<vmem>>, vector<4x8x1xf32>
      tpu.vector_store %arg9[%c0_43, %c0_44, %c0_45], %48 {strides = array<i32>} : memref<4x8x1xf32, #tpu.memory_space<vmem>>, vector<4x8x1xf32>,
      %cst_46 = arith.constant 0.000000e+00 : f32
      %50 = vector.broadcast %cst_46 : f32 to vector<4x8x1xf32>
      %c0_47 = arith.constant 0 : index
      %c0_48 = arith.constant 0 : index
      %c0_49 = arith.constant 0 : index
      %51 = vector.load %arg10[%c0_47, %c0_48, %c0_49] : memref<4x8x1xf32, #tpu.memory_space<vmem>>, vector<4x8x1xf32>
      tpu.vector_store %arg10[%c0_47, %c0_48, %c0_49], %50 {strides = array<i32>} : memref<4x8x1xf32, #tpu.memory_space<vmem>>, vector<4x8x1xf32>,
      %cst_50 = arith.constant 0.000000e+00 : f32
      %52 = vector.broadcast %cst_50 : f32 to vector<4x8x8xf32>
      %c0_51 = arith.constant 0 : index
      %c0_52 = arith.constant 0 : index
      %c0_53 = arith.constant 0 : index
      %53 = vector.load %arg11[%c0_51, %c0_52, %c0_53] : memref<4x8x8xf32, #tpu.memory_space<vmem>>, vector<4x8x8xf32>
      tpu.vector_store %arg11[%c0_51, %c0_52, %c0_53], %52 {strides = array<i32>} : memref<4x8x8xf32, #tpu.memory_space<vmem>>, vector<4x8x8xf32>,
    } else {
    }
    %c0 = arith.constant 0 : index
    %c0_1 = arith.constant 0 : index
    %c0_2 = arith.constant 0 : index
    %c0_3 = arith.constant 0 : index
    %3 = vector.load %arg4[%c0, %c0_1, %c0_2, %c0_3] : memref<1x4x8x8xbf16, #tpu.memory_space<vmem>>, vector<1x4x8x8xbf16>
    %4 = vector.shape_cast %3 : vector<1x4x8x8xbf16> to vector<4x8x8xbf16>
    %c0_4 = arith.constant 0 : index
    %c0_5 = arith.constant 0 : index
    %c0_6 = arith.constant 0 : index
    %c0_7 = arith.constant 0 : index
    %5 = vector.load %arg5[%c0_4, %c0_5, %c0_6, %c0_7] : memref<1x4x8x8xbf16, #tpu.memory_space<vmem>>, vector<1x4x8x8xbf16>
    %6 = vector.shape_cast %5 : vector<1x4x8x8xbf16> to vector<4x8x8xbf16>
    %c0_8 = arith.constant 0 : index
    %c0_9 = arith.constant 0 : index
    %c0_10 = arith.constant 0 : index
    %c0_11 = arith.constant 0 : index
    %7 = vector.load %arg6[%c0_8, %c0_9, %c0_10, %c0_11] : memref<1x4x8x8xbf16, #tpu.memory_space<vmem>>, vector<1x4x8x8xbf16>
    %8 = vector.shape_cast %7 : vector<1x4x8x8xbf16> to vector<4x8x8xbf16>
    "tpu.trace_start"() <{level = 10 : i32, message = "hqd,hkd->hqk"}> : () -> ()
    %cst = arith.constant dense<0.000000e+00> : vector<4x8x8xf32>
    %9 = tpu.matmul %4, %6, %cst {dimension_numbers = #tpu.dot_dimension_numbers<[2], [2], [1], [1], [0, 0, 0, 1, 1, 1], [0], [0]>} : vector<4x8x8xbf16>, vector<4x8x8xbf16>, vector<4x8x8xf32> -> vector<4x8x8xf32>
    "tpu.trace_stop"() : () -> ()
    %cst_12 = arith.constant 0.353553385 : f32
    %10 = vector.broadcast %cst_12 : f32 to vector<4x8x8xf32>
    %11 = arith.mulf %9, %10 : vector<4x8x8xf32>
    %c0_13 = arith.constant 0 : index
    %c0_14 = arith.constant 0 : index
    %c0_15 = arith.constant 0 : index
    %12 = vector.load %arg7[%c0_13, %c0_14, %c0_15] : memref<1x8x8xbf16, #tpu.memory_space<vmem>>, vector<1x8x8xbf16>
    %13 = vector.shape_cast %12 : vector<1x8x8xbf16> to vector<8x8xbf16>
    %cst_16 = arith.constant 0.000000e+00 : bf16
    %14 = vector.broadcast %cst_16 : bf16 to vector<8x8xbf16>
    %15 = arith.cmpf ogt, %13, %14 : vector<8x8xbf16>
    %cst_17 = arith.constant 0.000000e+00 : f32
    %cst_18 = arith.constant -1.000000e+30 : f32
    %16 = vector.broadcast %cst_17 : f32 to vector<8x8xf32>
    %17 = vector.broadcast %cst_18 : f32 to vector<8x8xf32>
    %18 = arith.select %15, %16, %17 : vector<8x8xi1>, vector<8x8xf32>
    %19 = vector.shape_cast %18 : vector<8x8xf32> to vector<1x8x8xf32>
    %20 = vector.broadcast %19 : vector<1x8x8xf32> to vector<4x8x8xf32>
    %21 = arith.addf %11, %20 : vector<4x8x8xf32>
    %c0_19 = arith.constant 0 : index
    %c0_20 = arith.constant 0 : index
    %c0_21 = arith.constant 0 : index
    %22 = vector.load %arg9[%c0_19, %c0_20, %c0_21] : memref<4x8x1xf32, #tpu.memory_space<vmem>>, vector<4x8x1xf32>
    %cst_22 = arith.constant dense<0xFF800000> : vector<4x8xf32>
    %23 = vector.multi_reduction <maximumf>, %21, %cst_22 [2] : vector<4x8x8xf32> to vector<4x8xf32>
    %24 = vector.shape_cast %23 : vector<4x8xf32> to vector<4x8x1xf32>
    %25 = arith.maximumf %22, %24 : vector<4x8x1xf32>
    %26 = arith.subf %22, %25 : vector<4x8x1xf32>
    %27 = math.exp %26 : vector<4x8x1xf32>
    %28 = vector.broadcast %25 : vector<4x8x1xf32> to vector<4x8x8xf32>
    %29 = arith.subf %21, %28 : vector<4x8x8xf32>
    %30 = math.exp %29 : vector<4x8x8xf32>
    %c0_23 = arith.constant 0 : index
    %c0_24 = arith.constant 0 : index
    %c0_25 = arith.constant 0 : index
    %31 = vector.load %arg10[%c0_23, %c0_24, %c0_25] : memref<4x8x1xf32, #tpu.memory_space<vmem>>, vector<4x8x1xf32>
    %32 = arith.mulf %27, %31 : vector<4x8x1xf32>
    %cst_26 = arith.constant dense<0.000000e+00> : vector<4x8xf32>
    %33 = vector.multi_reduction <add>, %30, %cst_26 [2] : vector<4x8x8xf32> to vector<4x8xf32>
    %34 = vector.shape_cast %33 : vector<4x8xf32> to vector<4x8x1xf32>
    %35 = arith.addf %32, %34 : vector<4x8x1xf32>
    %c0_27 = arith.constant 0 : index
    %c0_28 = arith.constant 0 : index
    %c0_29 = arith.constant 0 : index
    %36 = vector.load %arg10[%c0_27, %c0_28, %c0_29] : memref<4x8x1xf32, #tpu.memory_space<vmem>>, vector<4x8x1xf32>
    tpu.vector_store %arg10[%c0_27, %c0_28, %c0_29], %35 {strides = array<i32>} : memref<4x8x1xf32, #tpu.memory_space<vmem>>, vector<4x8x1xf32>,
    %c0_30 = arith.constant 0 : index
    %c0_31 = arith.constant 0 : index
    %c0_32 = arith.constant 0 : index
    %37 = vector.load %arg11[%c0_30, %c0_31, %c0_32] : memref<4x8x8xf32, #tpu.memory_space<vmem>>, vector<4x8x8xf32>
    %38 = vector.broadcast %27 : vector<4x8x1xf32> to vector<4x8x8xf32>
    %39 = arith.mulf %38, %37 : vector<4x8x8xf32>
    %40 = arith.truncf %30 : vector<4x8x8xf32> to vector<4x8x8xbf16>
    "tpu.trace_start"() <{level = 10 : i32, message = "hqk,hkd->hqd"}> : () -> ()
    %cst_33 = arith.constant dense<0.000000e+00> : vector<4x8x8xf32>
    %41 = tpu.matmul %40, %8, %cst_33 {dimension_numbers = #tpu.dot_dimension_numbers<[2], [1], [1], [2], [0, 0, 0, 1, 1, 2], [0], [0]>} : vector<4x8x8xbf16>, vector<4x8x8xbf16>, vector<4x8x8xf32> -> vector<4x8x8xf32>
    "tpu.trace_stop"() : () -> ()
    %42 = arith.addf %39, %41 : vector<4x8x8xf32>
    %c0_34 = arith.constant 0 : index
    %c0_35 = arith.constant 0 : index
    %c0_36 = arith.constant 0 : index
    %43 = vector.load %arg11[%c0_34, %c0_35, %c0_36] : memref<4x8x8xf32, #tpu.memory_space<vmem>>, vector<4x8x8xf32>
    tpu.vector_store %arg11[%c0_34, %c0_35, %c0_36], %42 {strides = array<i32>} : memref<4x8x8xf32, #tpu.memory_space<vmem>>, vector<4x8x8xf32>,
    %c0_37 = arith.constant 0 : index
    %c0_38 = arith.constant 0 : index
    %c0_39 = arith.constant 0 : index
    %44 = vector.load %arg9[%c0_37, %c0_38, %c0_39] : memref<4x8x1xf32, #tpu.memory_space<vmem>>, vector<4x8x1xf32>
    tpu.vector_store %arg9[%c0_37, %c0_38, %c0_39], %25 {strides = array<i32>} : memref<4x8x1xf32, #tpu.memory_space<vmem>>, vector<4x8x1xf32>,
    %c0_i32_40 = arith.constant 0 : i32
    %45 = arith.cmpi eq, %arg3, %c0_i32_40 : i32
    %46 = arith.extui %45 : i1 to i32
    %c0_i32_41 = arith.constant 0 : i32
    %47 = arith.cmpi ne, %46, %c0_i32_41 : i32
    scf.if %47 {
      %c0_42 = arith.constant 0 : index
      %c0_43 = arith.constant 0 : index
      %c0_44 = arith.constant 0 : index
      %48 = vector.load %arg11[%c0_42, %c0_43, %c0_44] : memref<4x8x8xf32, #tpu.memory_space<vmem>>, vector<4x8x8xf32>
      %c0_45 = arith.constant 0 : index
      %c0_46 = arith.constant 0 : index
      %c0_47 = arith.constant 0 : index
      %49 = vector.load %arg10[%c0_45, %c0_46, %c0_47] : memref<4x8x1xf32, #tpu.memory_space<vmem>>, vector<4x8x1xf32>
      %50 = tpu.reciprocal %49 {approx = true} : vector<4x8x1xf32> -> vector<4x8x1xf32>
      %51 = vector.broadcast %50 : vector<4x8x1xf32> to vector<4x8x8xf32>
      %52 = arith.mulf %48, %51 : vector<4x8x8xf32>
      %53 = arith.truncf %52 : vector<4x8x8xf32> to vector<4x8x8xbf16>
      %c0_48 = arith.constant 0 : index
      %c0_49 = arith.constant 0 : index
      %c0_50 = arith.constant 0 : index
      %c0_51 = arith.constant 0 : index
      %54 = vector.load %arg8[%c0_48, %c0_49, %c0_50, %c0_51] : memref<1x4x8x8xbf16, #tpu.memory_space<vmem>>, vector<1x4x8x8xbf16>
      %55 = vector.shape_cast %54 : vector<1x4x8x8xbf16> to vector<4x8x8xbf16>
      %56 = vector.shape_cast %53 : vector<4x8x8xbf16> to vector<1x4x8x8xbf16>
      tpu.vector_store %arg8[%c0_48, %c0_49, %c0_50, %c0_51], %56 {strides = array<i32>} : memref<1x4x8x8xbf16, #tpu.memory_space<vmem>>, vector<1x4x8x8xbf16>,
    } else {
    }
    return
  }
  func.func @transform_0(%arg0: i32, %arg1: i32, %arg2: i32, %arg3: i32) -> (i32, i32, i32, i32) {
    %c0_i32 = arith.constant 0 : i32
    %c0_i32_0 = arith.constant 0 : i32
    return %arg0, %arg1, %arg2, %c0_i32 : i32, i32, i32, i32
  }
  func.func @transform_1(%arg0: i32, %arg1: i32, %arg2: i32, %arg3: i32) -> (i32, i32, i32, i32) {
    %c0_i32 = arith.constant 0 : i32
    %c0_i32_0 = arith.constant 0 : i32
    return %arg0, %arg1, %arg3, %c0_i32 : i32, i32, i32, i32
  }
  func.func @transform_2(%arg0: i32, %arg1: i32, %arg2: i32, %arg3: i32) -> (i32, i32, i32, i32) {
    %c0_i32 = arith.constant 0 : i32
    %c0_i32_0 = arith.constant 0 : i32
    return %arg0, %arg1, %arg3, %c0_i32 : i32, i32, i32, i32
  }
  func.func @transform_3(%arg0: i32, %arg1: i32, %arg2: i32, %arg3: i32) -> (i32, i32, i32) {
    %c0_i32 = arith.constant 0 : i32
    return %arg0, %arg2, %arg3 : i32, i32, i32
  }
  func.func @transform_4(%arg0: i32, %arg1: i32, %arg2: i32, %arg3: i32) -> (i32, i32, i32, i32) {
    %c0_i32 = arith.constant 0 : i32
    %c0_i32_0 = arith.constant 0 : i32
    return %arg0, %arg1, %arg2, %c0_i32 : i32, i32, i32, i32
  }
}

module attributes {stable_mosaic.version = 11 : i64} {
  func.func @_matmul_residual_kernel(%arg0: i32, %arg1: i32, %arg2: i32, %arg3: memref<16x32xbf16, #tpu.memory_space<vmem>>, %arg4: memref<32x32xbf16, #tpu.memory_space<vmem>>, %arg5: memref<16x32xbf16, #tpu.memory_space<vmem>>, %arg6: memref<16x32xbf16, #tpu.memory_space<vmem>>, %arg7: memref<16x32xf32, #tpu.memory_space<vmem>>) attributes {dimension_semantics = [#tpu.dimension_semantics<parallel>, #tpu.dimension_semantics<parallel>, #tpu.dimension_semantics<arbitrary>], iteration_bounds = array<i64: 1, 1, 1>, scalar_prefetch = 0 : i64, scratch_operands = 1 : i64, tpu.core_type = #tpu.core_type<tc>, window_params = [{transform_indices = @transform_0, window_bounds = array<i64: 16, 32>}, {transform_indices = @transform_1, window_bounds = array<i64: 32, 32>}, {transform_indices = @transform_2, window_bounds = array<i64: 16, 32>}, {transform_indices = @transform_3, window_bounds = array<i64: 16, 32>}]} {
    %c0_i32 = arith.constant 0 : i32
    %0 = arith.cmpi eq, %arg2, %c0_i32 : i32
    %1 = arith.extui %0 : i1 to i32
    %c0_i32_0 = arith.constant 0 : i32
    %2 = arith.cmpi ne, %1, %c0_i32_0 : i32
    scf.if %2 {
      %cst_10 = arith.constant 0.000000e+00 : f32
      %12 = vector.broadcast %cst_10 : f32 to vector<16x32xf32>
      %c0_11 = arith.constant 0 : index
      %c0_12 = arith.constant 0 : index
      %13 = vector.load %arg7[%c0_11, %c0_12] : memref<16x32xf32, #tpu.memory_space<vmem>>, vector<16x32xf32>
      tpu.vector_store %arg7[%c0_11, %c0_12], %12 {strides = array<i32>} : memref<16x32xf32, #tpu.memory_space<vmem>>, vector<16x32xf32>,
    } else {
    }
    %c0 = arith.constant 0 : index
    %c0_1 = arith.constant 0 : index
    %3 = vector.load %arg7[%c0, %c0_1] : memref<16x32xf32, #tpu.memory_space<vmem>>, vector<16x32xf32>
    %c0_2 = arith.constant 0 : index
    %c0_3 = arith.constant 0 : index
    %4 = vector.load %arg3[%c0_2, %c0_3] : memref<16x32xbf16, #tpu.memory_space<vmem>>, vector<16x32xbf16>
    %c0_4 = arith.constant 0 : index
    %c0_5 = arith.constant 0 : index
    %5 = vector.load %arg4[%c0_4, %c0_5] : memref<32x32xbf16, #tpu.memory_space<vmem>>, vector<32x32xbf16>
    %cst = arith.constant dense<0.000000e+00> : vector<16x32xf32>
    %6 = tpu.matmul %4, %5, %cst {dimension_numbers = #tpu.dot_dimension_numbers<[1], [0], [0], [1], [0, 0, 1, 1], [], []>} : vector<16x32xbf16>, vector<32x32xbf16>, vector<16x32xf32> -> vector<16x32xf32>
    %7 = arith.addf %3, %6 : vector<16x32xf32>
    %c0_6 = arith.constant 0 : index
    %c0_7 = arith.constant 0 : index
    %8 = vector.load %arg7[%c0_6, %c0_7] : memref<16x32xf32, #tpu.memory_space<vmem>>, vector<16x32xf32>
    tpu.vector_store %arg7[%c0_6, %c0_7], %7 {strides = array<i32>} : memref<16x32xf32, #tpu.memory_space<vmem>>, vector<16x32xf32>,
    %c0_i32_8 = arith.constant 0 : i32
    %9 = arith.cmpi eq, %arg2, %c0_i32_8 : i32
    %10 = arith.extui %9 : i1 to i32
    %c0_i32_9 = arith.constant 0 : i32
    %11 = arith.cmpi ne, %10, %c0_i32_9 : i32
    scf.if %11 {
      %c0_10 = arith.constant 0 : index
      %c0_11 = arith.constant 0 : index
      %12 = vector.load %arg7[%c0_10, %c0_11] : memref<16x32xf32, #tpu.memory_space<vmem>>, vector<16x32xf32>
      %c0_12 = arith.constant 0 : index
      %c0_13 = arith.constant 0 : index
      %13 = vector.load %arg5[%c0_12, %c0_13] : memref<16x32xbf16, #tpu.memory_space<vmem>>, vector<16x32xbf16>
      %14 = arith.extf %13 : vector<16x32xbf16> to vector<16x32xf32>
      %15 = arith.addf %12, %14 : vector<16x32xf32>
      %16 = arith.truncf %15 : vector<16x32xf32> to vector<16x32xbf16>
      %c0_14 = arith.constant 0 : index
      %c0_15 = arith.constant 0 : index
      %17 = vector.load %arg6[%c0_14, %c0_15] : memref<16x32xbf16, #tpu.memory_space<vmem>>, vector<16x32xbf16>
      tpu.vector_store %arg6[%c0_14, %c0_15], %16 {strides = array<i32>} : memref<16x32xbf16, #tpu.memory_space<vmem>>, vector<16x32xbf16>,
    } else {
    }
    return
  }
  func.func @transform_0(%arg0: i32, %arg1: i32, %arg2: i32) -> (i32, i32) {
    %c0_i32 = arith.constant 0 : i32
    return %arg0, %arg2 : i32, i32
  }
  func.func @transform_1(%arg0: i32, %arg1: i32, %arg2: i32) -> (i32, i32) {
    %c0_i32 = arith.constant 0 : i32
    return %arg2, %arg1 : i32, i32
  }
  func.func @transform_2(%arg0: i32, %arg1: i32, %arg2: i32) -> (i32, i32) {
    %c0_i32 = arith.constant 0 : i32
    return %arg0, %arg1 : i32, i32
  }
  func.func @transform_3(%arg0: i32, %arg1: i32, %arg2: i32) -> (i32, i32) {
    %c0_i32 = arith.constant 0 : i32
    return %arg0, %arg1 : i32, i32
  }
}

module attributes {stable_mosaic.version = 11 : i64} {
  func.func @_norm_mlp_kernel(%arg0: i32, %arg1: i32, %arg2: memref<16x32xbf16, #tpu.memory_space<vmem>>, %arg3: memref<1x32xbf16, #tpu.memory_space<vmem>>, %arg4: memref<32x64xbf16, #tpu.memory_space<vmem>>, %arg5: memref<32x64xbf16, #tpu.memory_space<vmem>>, %arg6: memref<64x32xbf16, #tpu.memory_space<vmem>>, %arg7: memref<16x32xbf16, #tpu.memory_space<vmem>>, %arg8: memref<16x32xbf16, #tpu.memory_space<vmem>>, %arg9: memref<16x32xf32, #tpu.memory_space<vmem>>) attributes {dimension_semantics = [#tpu.dimension_semantics<parallel>, #tpu.dimension_semantics<arbitrary>], iteration_bounds = array<i64: 1, 1>, scalar_prefetch = 0 : i64, scratch_operands = 2 : i64, tpu.core_type = #tpu.core_type<tc>, window_params = [{transform_indices = @transform_0, window_bounds = array<i64: 16, 32>}, {pipeline_mode = #tpu.pipeline_mode<synchronous>, transform_indices = @transform_1, window_bounds = array<i64: 1, 32>}, {transform_indices = @transform_2, window_bounds = array<i64: 32, 64>}, {transform_indices = @transform_3, window_bounds = array<i64: 32, 64>}, {transform_indices = @transform_4, window_bounds = array<i64: 64, 32>}, {transform_indices = @transform_5, window_bounds = array<i64: 16, 32>}]} {
    %c0_i32 = arith.constant 0 : i32
    %0 = arith.cmpi eq, %arg1, %c0_i32 : i32
    %1 = arith.extui %0 : i1 to i32
    %c0_i32_0 = arith.constant 0 : i32
    %2 = arith.cmpi ne, %1, %c0_i32_0 : i32
    scf.if %2 {
      %c0_17 = arith.constant 0 : index
      %c0_18 = arith.constant 0 : index
      %24 = vector.load %arg2[%c0_17, %c0_18] : memref<16x32xbf16, #tpu.memory_space<vmem>>, vector<16x32xbf16>
      %25 = arith.extf %24 : vector<16x32xbf16> to vector<16x32xf32>
      %26 = arith.mulf %25, %25 : vector<16x32xf32>
      %cst_19 = arith.constant dense<0.000000e+00> : vector<16xf32>
      %27 = vector.multi_reduction <add>, %26, %cst_19 [1] : vector<16x32xf32> to vector<16xf32>
      %28 = vector.shape_cast %27 : vector<16xf32> to vector<16x1xf32>
      %cst_20 = arith.constant 3.200000e+01 : f32
      %29 = vector.broadcast %cst_20 : f32 to vector<16x1xf32>
      %30 = arith.divf %28, %29 : vector<16x1xf32>
      %cst_21 = arith.constant 9.99999997E-7 : f32
      %31 = vector.broadcast %cst_21 : f32 to vector<16x1xf32>
      %32 = arith.addf %30, %31 : vector<16x1xf32>
      %33 = math.rsqrt %32 : vector<16x1xf32>
      %34 = vector.broadcast %33 : vector<16x1xf32> to vector<16x32xf32>
      %35 = arith.mulf %25, %34 : vector<16x32xf32>
      %c0_22 = arith.constant 0 : index
      %c0_23 = arith.constant 0 : index
      %36 = vector.load %arg3[%c0_22, %c0_23] : memref<1x32xbf16, #tpu.memory_space<vmem>>, vector<1x32xbf16>
      %37 = arith.extf %36 : vector<1x32xbf16> to vector<1x32xf32>
      %38 = vector.broadcast %37 : vector<1x32xf32> to vector<16x32xf32>
      %39 = arith.mulf %35, %38 : vector<16x32xf32>
      %40 = arith.truncf %39 : vector<16x32xf32> to vector<16x32xbf16>
      %c0_24 = arith.constant 0 : index
      %c0_25 = arith.constant 0 : index
      %41 = vector.load %arg8[%c0_24, %c0_25] : memref<16x32xbf16, #tpu.memory_space<vmem>>, vector<16x32xbf16>
      tpu.vector_store %arg8[%c0_24, %c0_25], %40 {strides = array<i32>} : memref<16x32xbf16, #tpu.memory_space<vmem>>, vector<16x32xbf16>,
      %cst_26 = arith.constant 0.000000e+00 : f32
      %42 = vector.broadcast %cst_26 : f32 to vector<16x32xf32>
      %c0_27 = arith.constant 0 : index
      %c0_28 = arith.constant 0 : index
      %43 = vector.load %arg9[%c0_27, %c0_28] : memref<16x32xf32, #tpu.memory_space<vmem>>, vector<16x32xf32>
      tpu.vector_store %arg9[%c0_27, %c0_28], %42 {strides = array<i32>} : memref<16x32xf32, #tpu.memory_space<vmem>>, vector<16x32xf32>,
    } else {
    }
    %c0 = arith.constant 0 : index
    %c0_1 = arith.constant 0 : index
    %3 = vector.load %arg8[%c0, %c0_1] : memref<16x32xbf16, #tpu.memory_space<vmem>>, vector<16x32xbf16>
    %c0_2 = arith.constant 0 : index
    %c0_3 = arith.constant 0 : index
    %4 = vector.load %arg4[%c0_2, %c0_3] : memref<32x64xbf16, #tpu.memory_space<vmem>>, vector<32x64xbf16>
    %cst = arith.constant dense<0.000000e+00> : vector<16x64xf32>
    %5 = tpu.matmul %3, %4, %cst {dimension_numbers = #tpu.dot_dimension_numbers<[1], [0], [0], [1], [0, 0, 1, 1], [], []>} : vector<16x32xbf16>, vector<32x64xbf16>, vector<16x64xf32> -> vector<16x64xf32>
    %c0_4 = arith.constant 0 : index
    %c0_5 = arith.constant 0 : index
    %6 = vector.load %arg5[%c0_4, %c0_5] : memref<32x64xbf16, #tpu.memory_space<vmem>>, vector<32x64xbf16>
    %cst_6 = arith.constant dense<0.000000e+00> : vector<16x64xf32>
    %7 = tpu.matmul %3, %6, %cst_6 {dimension_numbers = #tpu.dot_dimension_numbers<[1], [0], [0], [1], [0, 0, 1, 1], [], []>} : vector<16x32xbf16>, vector<32x64xbf16>, vector<16x64xf32> -> vector<16x64xf32>
    %8 = arith.negf %5 : vector<16x64xf32>
    %9 = math.exp %8 : vector<16x64xf32>
    %cst_7 = arith.constant 1.000000e+00 : f32
    %10 = vector.broadcast %cst_7 : f32 to vector<16x64xf32>
    %11 = arith.addf %10, %9 : vector<16x64xf32>
    %12 = arith.divf %10, %11 : vector<16x64xf32>
    %13 = arith.mulf %5, %12 : vector<16x64xf32>
    %14 = arith.mulf %13, %7 : vector<16x64xf32>
    %15 = arith.truncf %14 : vector<16x64xf32> to vector<16x64xbf16>
    %c0_8 = arith.constant 0 : index
    %c0_9 = arith.constant 0 : index
    %16 = vector.load %arg9[%c0_8, %c0_9] : memref<16x32xf32, #tpu.memory_space<vmem>>, vector<16x32xf32>
    %c0_10 = arith.constant 0 : index
    %c0_11 = arith.constant 0 : index
    %17 = vector.load %arg6[%c0_10, %c0_11] : memref<64x32xbf16, #tpu.memory_space<vmem>>, vector<64x32xbf16>
    %cst_12 = arith.constant dense<0.000000e+00> : vector<16x32xf32>
    %18 = tpu.matmul %15, %17, %cst_12 {dimension_numbers = #tpu.dot_dimension_numbers<[1], [0], [0], [1], [0, 0, 1, 1], [], []>} : vector<16x64xbf16>, vector<64x32xbf16>, vector<16x32xf32> -> vector<16x32xf32>
    %19 = arith.addf %16, %18 : vector<16x32xf32>
    %c0_13 = arith.constant 0 : index
    %c0_14 = arith.constant 0 : index
    %20 = vector.load %arg9[%c0_13, %c0_14] : memref<16x32xf32, #tpu.memory_space<vmem>>, vector<16x32xf32>
    tpu.vector_store %arg9[%c0_13, %c0_14], %19 {strides = array<i32>} : memref<16x32xf32, #tpu.memory_space<vmem>>, vector<16x32xf32>,
    %c0_i32_15 = arith.constant 0 : i32
    %21 = arith.cmpi eq, %arg1, %c0_i32_15 : i32
    %22 = arith.extui %21 : i1 to i32
    %c0_i32_16 = arith.constant 0 : i32
    %23 = arith.cmpi ne, %22, %c0_i32_16 : i32
    scf.if %23 {
      %c0_17 = arith.constant 0 : index
      %c0_18 = arith.constant 0 : index
      %24 = vector.load %arg9[%c0_17, %c0_18] : memref<16x32xf32, #tpu.memory_space<vmem>>, vector<16x32xf32>
      %c0_19 = arith.constant 0 : index
      %c0_20 = arith.constant 0 : index
      %25 = vector.load %arg2[%c0_19, %c0_20] : memref<16x32xbf16, #tpu.memory_space<vmem>>, vector<16x32xbf16>
      %26 = arith.extf %25 : vector<16x32xbf16> to vector<16x32xf32>
      %27 = arith.addf %24, %26 : vector<16x32xf32>
      %28 = arith.truncf %27 : vector<16x32xf32> to vector<16x32xbf16>
      %c0_21 = arith.constant 0 : index
      %c0_22 = arith.constant 0 : index
      %29 = vector.load %arg7[%c0_21, %c0_22] : memref<16x32xbf16, #tpu.memory_space<vmem>>, vector<16x32xbf16>
      tpu.vector_store %arg7[%c0_21, %c0_22], %28 {strides = array<i32>} : memref<16x32xbf16, #tpu.memory_space<vmem>>, vector<16x32xbf16>,
    } else {
    }
    return
  }
  func.func @transform_0(%arg0: i32, %arg1: i32) -> (i32, i32) {
    %c0_i32 = arith.constant 0 : i32
    %c0_i32_0 = arith.constant 0 : i32
    return %arg0, %c0_i32 : i32, i32
  }
  func.func @transform_1(%arg0: i32, %arg1: i32) -> (i32, i32) {
    %c0_i32 = arith.constant 0 : i32
    %c0_i32_0 = arith.constant 0 : i32
    %c0_i32_1 = arith.constant 0 : i32
    return %c0_i32, %c0_i32_0 : i32, i32
  }
  func.func @transform_2(%arg0: i32, %arg1: i32) -> (i32, i32) {
    %c0_i32 = arith.constant 0 : i32
    %c0_i32_0 = arith.constant 0 : i32
    return %c0_i32, %arg1 : i32, i32
  }
  func.func @transform_3(%arg0: i32, %arg1: i32) -> (i32, i32) {
    %c0_i32 = arith.constant 0 : i32
    %c0_i32_0 = arith.constant 0 : i32
    return %c0_i32, %arg1 : i32, i32
  }
  func.func @transform_4(%arg0: i32, %arg1: i32) -> (i32, i32) {
    %c0_i32 = arith.constant 0 : i32
    %c0_i32_0 = arith.constant 0 : i32
    return %arg1, %c0_i32 : i32, i32
  }
  func.func @transform_5(%arg0: i32, %arg1: i32) -> (i32, i32) {
    %c0_i32 = arith.constant 0 : i32
    %c0_i32_0 = arith.constant 0 : i32
    return %arg0, %c0_i32 : i32, i32
  }
}

module attributes {stable_mosaic.version = 11 : i64} {
  func.func @_norm_matmul_kernel(%arg0: i32, %arg1: i32, %arg2: memref<16x32xbf16, #tpu.memory_space<vmem>>, %arg3: memref<1x32xbf16, #tpu.memory_space<vmem>>, %arg4: memref<32x64xbf16, #tpu.memory_space<vmem>>, %arg5: memref<16x64xf32, #tpu.memory_space<vmem>>, %arg6: memref<16x32xbf16, #tpu.memory_space<vmem>>) attributes {dimension_semantics = [#tpu.dimension_semantics<parallel>, #tpu.dimension_semantics<arbitrary>], iteration_bounds = array<i64: 1, 1>, scalar_prefetch = 0 : i64, scratch_operands = 1 : i64, tpu.core_type = #tpu.core_type<tc>, window_params = [{transform_indices = @transform_0, window_bounds = array<i64: 16, 32>}, {pipeline_mode = #tpu.pipeline_mode<synchronous>, transform_indices = @transform_1, window_bounds = array<i64: 1, 32>}, {transform_indices = @transform_2, window_bounds = array<i64: 32, 64>}, {transform_indices = @transform_3, window_bounds = array<i64: 16, 64>}]} {
    %c0_i32 = arith.constant 0 : i32
    %0 = arith.cmpi eq, %arg1, %c0_i32 : i32
    %1 = arith.extui %0 : i1 to i32
    %c0_i32_0 = arith.constant 0 : i32
    %2 = arith.cmpi ne, %1, %c0_i32_0 : i32
    scf.if %2 {
      %c0_6 = arith.constant 0 : index
      %c0_7 = arith.constant 0 : index
      %7 = vector.load %arg2[%c0_6, %c0_7] : memref<16x32xbf16, #tpu.memory_space<vmem>>, vector<16x32xbf16>
      %8 = arith.extf %7 : vector<16x32xbf16> to vector<16x32xf32>
      %9 = arith.mulf %8, %8 : vector<16x32xf32>
      %cst_8 = arith.constant dense<0.000000e+00> : vector<16xf32>
      %10 = vector.multi_reduction <add>, %9, %cst_8 [1] : vector<16x32xf32> to vector<16xf32>
      %11 = vector.shape_cast %10 : vector<16xf32> to vector<16x1xf32>
      %cst_9 = arith.constant 3.200000e+01 : f32
      %12 = vector.broadcast %cst_9 : f32 to vector<16x1xf32>
      %13 = arith.divf %11, %12 : vector<16x1xf32>
      %cst_10 = arith.constant 9.99999997E-7 : f32
      %14 = vector.broadcast %cst_10 : f32 to vector<16x1xf32>
      %15 = arith.addf %13, %14 : vector<16x1xf32>
      %16 = math.rsqrt %15 : vector<16x1xf32>
      %17 = vector.broadcast %16 : vector<16x1xf32> to vector<16x32xf32>
      %18 = arith.mulf %8, %17 : vector<16x32xf32>
      %c0_11 = arith.constant 0 : index
      %c0_12 = arith.constant 0 : index
      %19 = vector.load %arg3[%c0_11, %c0_12] : memref<1x32xbf16, #tpu.memory_space<vmem>>, vector<1x32xbf16>
      %20 = arith.extf %19 : vector<1x32xbf16> to vector<1x32xf32>
      %21 = vector.broadcast %20 : vector<1x32xf32> to vector<16x32xf32>
      %22 = arith.mulf %18, %21 : vector<16x32xf32>
      %23 = arith.truncf %22 : vector<16x32xf32> to vector<16x32xbf16>
      %c0_13 = arith.constant 0 : index
      %c0_14 = arith.constant 0 : index
      %24 = vector.load %arg6[%c0_13, %c0_14] : memref<16x32xbf16, #tpu.memory_space<vmem>>, vector<16x32xbf16>
      tpu.vector_store %arg6[%c0_13, %c0_14], %23 {strides = array<i32>} : memref<16x32xbf16, #tpu.memory_space<vmem>>, vector<16x32xbf16>,
    } else {
    }
    %c0 = arith.constant 0 : index
    %c0_1 = arith.constant 0 : index
    %3 = vector.load %arg6[%c0, %c0_1] : memref<16x32xbf16, #tpu.memory_space<vmem>>, vector<16x32xbf16>
    %c0_2 = arith.constant 0 : index
    %c0_3 = arith.constant 0 : index
    %4 = vector.load %arg4[%c0_2, %c0_3] : memref<32x64xbf16, #tpu.memory_space<vmem>>, vector<32x64xbf16>
    %cst = arith.constant dense<0.000000e+00> : vector<16x64xf32>
    %5 = tpu.matmul %3, %4, %cst {dimension_numbers = #tpu.dot_dimension_numbers<[1], [0], [0], [1], [0, 0, 1, 1], [], []>} : vector<16x32xbf16>, vector<32x64xbf16>, vector<16x64xf32> -> vector<16x64xf32>
    %c0_4 = arith.constant 0 : index
    %c0_5 = arith.constant 0 : index
    %6 = vector.load %arg5[%c0_4, %c0_5] : memref<16x64xf32, #tpu.memory_space<vmem>>, vector<16x64xf32>
    tpu.vector_store %arg5[%c0_4, %c0_5], %5 {strides = array<i32>} : memref<16x64xf32, #tpu.memory_space<vmem>>, vector<16x64xf32>,
    return
  }
  func.func @transform_0(%arg0: i32, %arg1: i32) -> (i32, i32) {
    %c0_i32 = arith.constant 0 : i32
    %c0_i32_0 = arith.constant 0 : i32
    return %arg0, %c0_i32 : i32, i32
  }
  func.func @transform_1(%arg0: i32, %arg1: i32) -> (i32, i32) {
    %c0_i32 = arith.constant 0 : i32
    %c0_i32_0 = arith.constant 0 : i32
    %c0_i32_1 = arith.constant 0 : i32
    return %c0_i32, %c0_i32_0 : i32, i32
  }
  func.func @transform_2(%arg0: i32, %arg1: i32) -> (i32, i32) {
    %c0_i32 = arith.constant 0 : i32
    %c0_i32_0 = arith.constant 0 : i32
    return %c0_i32, %arg1 : i32, i32
  }
  func.func @transform_3(%arg0: i32, %arg1: i32) -> (i32, i32) {
    %c0_i32 = arith.constant 0 : i32
    return %arg0, %arg1 : i32, i32
  }
}

</mosaic_0001>

<llo_original>
// kernel: closed_call.13
$region0: #{closed_call.13}
  #allocation0 [shape = 'u32[]', space=smem, size = 0x4, offset = 0x4, fixed_abs, tag = 'smem constant byte address 0x4 - core index']
  #allocation1 [shape = 'u32[72,128]{1,0:T(1,128)}', space=vmem, size = 0x9000, scoped, tag = 'internal scratch']
  #allocation2 [shape = 'bf16[16,32]{1,0:T(8,128)(2,1)}', space=vmem, size = 0x1000, scoped, tag = 'scratch operand']
  %s0 = inlined_call_operand.vmem [shape: bf16[16,32], index: 0, kind: input, shape index: {}]
  %s1 = inlined_call_operand.vmem [shape: bf16[1,32], index: 1, kind: input, shape index: {}]
  %s2 = inlined_call_operand.vmem [shape: bf16[32,96], index: 2, kind: input, shape index: {}]
  %s3 = inlined_call_operand.vmem [shape: bf16[16,96], index: 3, kind: output, shape index: {}]
  %s4 = sld [smem:[#allocation0]]
  $region26: #{closed_call.13} parent=0
    _
  %s6 = ssub.s32 1, %s4
  %s7 = scalar_select 0, %s6, %s4
  // Predicated region
  $region2: #{closed_call.13} parent=0 // pred_check
    _
  $region3: #{closed_call.13} parent=0 // pred_check_branch
    %9 = sbr.rel (0) target = $region5
  $region4: #{closed_call.13} parent=0 // pred_region
    _
  $region5: #{closed_call.13} parent=0 // pred_fallthru
    _
  // Predicated region
  $region6: #{closed_call.13} parent=0 // pred_check
    _
  $region7: #{closed_call.13} parent=0 // pred_check_branch
    %11 = sbr.rel (0) target = $region9
  $region8: #{closed_call.13} parent=0 // pred_region
    _
  $region9: #{closed_call.13} parent=0 // pred_fallthru
    _
  // Predicated region
  $region10: #{closed_call.13} parent=0 // pred_check
    _
  $region11: #{closed_call.13} parent=0 // pred_check_branch
    %13 = sbr.rel (0) target = $region13
  $region12: #{closed_call.13} parent=0 // pred_region
    _
  $region13: #{closed_call.13} parent=0 // pred_fallthru
    _
  %p15 = scmp.eq.s32.totalorder 0, 0
  // Predicated region
  $region14: #{closed_call.13} parent=0 // pred_check
    %p16 = pneg %p15
  $region15: #{closed_call.13} parent=0 // pred_check_branch
    %18 = sbr.rel (%p16) target = $region17
  $region16: #{closed_call.13} parent=0 // pred_region
    %v19 = vld [vmem:[%s0] sm:$0xf]
    %v20 = vld [vmem:[%s0 + $0x4] sm:$0xf]
    %v21 = vunpack.c.l.bf16 %v19
    %v22 = vunpack.c.l.bf16 %v20
    %v23 = vmul.f32 %v21, %v21
    %v24 = vmul.f32 %v22, %v22
    %vm25 = vcmask 261120
    %v26 = vsel %vm25, %v23, 0.0
    %27 = vadd.xlane.f32.xlu0 %v26
    %v28 = vpop.xlane.xlu0 %27
    %v29 = vsel %vm25, %v24, 0.0
    %30 = vadd.xlane.f32.xlu0 %v29
    %v31 = vpop.xlane.xlu0 %30
    %v32 = vrcp.pop 32.0
    %v33 = vmul.f32 32.0, %v32
    %v34 = vsub.f32 1.0, %v33
    %v35 = vmul.f32 %v32, %v34
    %v36 = vadd.f32 %v32, %v35
    %vm37 = vweird.f32 %v32
    %v38 = vsel %vm37, %v32, %v36
    %v39 = vmul.f32 %v28, %v38
    %v40 = vmul.f32 %v31, %v38
    %v41 = vadd.f32 %v39, 1e-06
    %v42 = vadd.f32 %v40, 1e-06
    %v43 = vrsqrt.pop %v41
    %v44 = vmul.f32 %v43, %v41
    %v45 = vmul.f32 %v44, %v43
    %v46 = vmul.f32 0.5, %v45
    %v47 = vsub.f32 1.5, %v46
    %v48 = vmul.f32 %v43, %v47
    %vm49 = vweird.f32 %v41
    %vm50 = vweird.f32 %v43
    %vm51 = vmor %vm49, %vm50
    %v52 = vsel %vm51, %v43, %v48
    %v53 = vrsqrt.pop %v42
    %v54 = vmul.f32 %v53, %v42
    %v55 = vmul.f32 %v54, %v53
    %v56 = vmul.f32 0.5, %v55
    %v57 = vsub.f32 1.5, %v56
    %v58 = vmul.f32 %v53, %v57
    %vm59 = vweird.f32 %v42
    %vm60 = vweird.f32 %v53
    %vm61 = vmor %vm59, %vm60
    %v62 = vsel %vm61, %v53, %v58
    %v63 = vmul.f32 %v21, %v52
    %v64 = vmul.f32 %v22, %v62
    %v65 = vld [vmem:[%s1] sm:$0x1]
    %v66 = vunpack.c.l.bf16 %v65
    %v67 = vperm.slane %v66, 0
    %v68 = vmul.f32 %v63, %v67
    %v69 = vmul.f32 %v64, %v67
    %v70 = vpack.c.bf16 %v68, %v68
    %v71 = vpack.c.bf16 %v69, %v69
    %vm72 = vcmask 257024
    %73 = vst.msk [vmem:[#allocation2] sm:$0xf] %vm72, %v70
    %74 = vst.msk [vmem:[#allocation2 + $0x4] sm:$0xf] %vm72, %v71
  $region17: #{closed_call.13} parent=0 // pred_fallthru
    _
  %v75 = vld [vmem:[#allocation2] sm:$0xf]
  %v76 = vld [vmem:[#allocation2 + $0x4] sm:$0xf]
  %v77 = vld [vmem:[%s2] sm:$0xf]
  %v78 = vld [vmem:[%s2 + $0x4] sm:$0xf]
  %v79 = vld [vmem:[%s2 + $0x8] sm:$0xf]
  %v80 = vld [vmem:[%s2 + $0xc] sm:$0xf]
  %v83 = vunpack.c.l.b16 %v75
  %v84 = vunpack.c.l.b16 %v76
  %v85 = vpack.c.b16 %v84, %v83
  %v90 = vunpack.c.l.b16 %v77
  %v91 = vunpack.c.l.b16 %v78
  %v92 = vunpack.c.l.b16 %v79
  %v93 = vunpack.c.l.b16 %v80
  %v94 = vpack.c.b16 %v91, %v90
  %v95 = vpack.c.b16 %v93, %v92
  %vm98 = vcmask 261120
  %v100 = vsel %vm98, %v85, 0
  %102 = vmatpush.bf16.msra.mxu0 0
  %103 = vmatpush.bf16.msra.mxu0 0
  %104 = vmatpush.bf16.msra.mxu0 0
  %105 = vmatpush.bf16.msra.mxu0 0
  %106 = vmatpush.bf16.msra.mxu0 0
  %107 = vmatpush.bf16.msra.mxu0 0
  %108 = vmatpush.bf16.msra.mxu0 %v95
  %109 = vmatpush.bf16.msra.mxu0 %v94
  %110 = vmatmul.bf16.gmra.mxu0 %v100
  %v111 = vpop.f32.mrf.mxu0
  %v112 = vadd.f32 0.0, %v111
  %v113 = vpop.f32.mrf.mxu0
  %v114 = vadd.f32 0.0, %v113
  %115 = vdwg.mxu0
  %v116 = vpack.c.bf16 %v112, %v112
  %v117 = vpack.c.bf16 %v114, %v114
  %vm118 = vcmask 781312
  %119 = vst.msk [vmem:[%s3] sm:$0xf] %vm118, %v116
  %120 = vst.msk [vmem:[%s3 + $0x4] sm:$0xf] %vm118, %v117
  // Predicated region
  $region18: #{closed_call.13} parent=0 // pred_check
    _
  $region19: #{closed_call.13} parent=0 // pred_check_branch
    %122 = sbr.rel (0) target = $region21
  $region20: #{closed_call.13} parent=0 // pred_region
    _
  $region21: #{closed_call.13} parent=0 // pred_fallthru
    _
  // Predicated region
  $region22: #{closed_call.13} parent=0 // pred_check
    _
  $region23: #{closed_call.13} parent=0 // pred_check_branch
    %124 = sbr.rel (0) target = $region25
  $region24: #{closed_call.13} parent=0 // pred_region
    _
  $region25: #{closed_call.13} parent=0 // pred_fallthru
    _

// kernel: closed_call.15
$region0: #{closed_call.15}
  #allocation0 [shape = 'u32[]', space=smem, size = 0x4, offset = 0x4, fixed_abs, tag = 'smem constant byte address 0x4 - core index']
  #allocation1 [shape = 'u32[72,128]{1,0:T(1,128)}', space=vmem, size = 0x9000, scoped, tag = 'internal scratch']
  #allocation2 [shape = 'f32[16,32]{1,0:T(8,128)}', space=vmem, size = 0x2000, scoped, tag = 'scratch operand']
  %s0 = inlined_call_operand.vmem [shape: bf16[16,32], index: 0, kind: input, shape index: {}]
  %s1 = inlined_call_operand.vmem [shape: bf16[32,32], index: 1, kind: input, shape index: {}]
  %s2 = inlined_call_operand.vmem [shape: bf16[16,32], index: 2, kind: input, shape index: {}]
  %s3 = inlined_call_operand.vmem [shape: bf16[16,32], index: 3, kind: output, shape index: {}]
  %s4 = sld [smem:[#allocation0]]
  $region30: #{closed_call.15} parent=0
    _
  %s6 = ssub.s32 1, %s4
  %s7 = scalar_select 0, %s6, %s4
  // Predicated region
  $region2: #{closed_call.15} parent=0 // pred_check
    _
  $region3: #{closed_call.15} parent=0 // pred_check_branch
    %9 = sbr.rel (0) target = $region5
  $region4: #{closed_call.15} parent=0 // pred_region
    _
  $region5: #{closed_call.15} parent=0 // pred_fallthru
    _
  // Predicated region
  $region6: #{closed_call.15} parent=0 // pred_check
    _
  $region7: #{closed_call.15} parent=0 // pred_check_branch
    %11 = sbr.rel (0) target = $region9
  $region8: #{closed_call.15} parent=0 // pred_region
    _
  $region9: #{closed_call.15} parent=0 // pred_fallthru
    _
  // Predicated region
  $region10: #{closed_call.15} parent=0 // pred_check
    _
  $region11: #{closed_call.15} parent=0 // pred_check_branch
    %13 = sbr.rel (0) target = $region13
  $region12: #{closed_call.15} parent=0 // pred_region
    _
  $region13: #{closed_call.15} parent=0 // pred_fallthru
    _
  %p15 = scmp.eq.s32.totalorder 0, 0
  // Predicated region
  $region14: #{closed_call.15} parent=0 // pred_check
    %p16 = pneg %p15
  $region15: #{closed_call.15} parent=0 // pred_check_branch
    %18 = sbr.rel (%p16) target = $region17
  $region16: #{closed_call.15} parent=0 // pred_region
    %vm19 = vcmask 261120
    %20 = vst.msk [vmem:[#allocation2] sm:$0xff] %vm19, 0.0
    %21 = vst.msk [vmem:[#allocation2 + $0x8] sm:$0xff] %vm19, 0.0
  $region17: #{closed_call.15} parent=0 // pred_fallthru
    _
  %v22 = vld [vmem:[#allocation2] sm:$0xff]
  %v23 = vld [vmem:[#allocation2 + $0x8] sm:$0xff]
  %v24 = vld [vmem:[%s0] sm:$0xf]
  %v25 = vld [vmem:[%s0 + $0x4] sm:$0xf]
  %v26 = vld [vmem:[%s1] sm:$0xf]
  %v27 = vld [vmem:[%s1 + $0x4] sm:$0xf]
  %v28 = vld [vmem:[%s1 + $0x8] sm:$0xf]
  %v29 = vld [vmem:[%s1 + $0xc] sm:$0xf]
  %v32 = vunpack.c.l.b16 %v24
  %v33 = vunpack.c.l.b16 %v25
  %v34 = vpack.c.b16 %v33, %v32
  %v39 = vunpack.c.l.b16 %v26
  %v40 = vunpack.c.l.b16 %v27
  %v41 = vunpack.c.l.b16 %v28
  %v42 = vunpack.c.l.b16 %v29
  %v43 = vpack.c.b16 %v40, %v39
  %v44 = vpack.c.b16 %v42, %v41
  %vm47 = vcmask 261120
  %v49 = vsel %vm47, %v34, 0
  %51 = vmatpush.bf16.msra.mxu0 0
  %52 = vmatpush.bf16.msra.mxu0 0
  %53 = vmatpush.bf16.msra.mxu0 0
  %54 = vmatpush.bf16.msra.mxu0 0
  %55 = vmatpush.bf16.msra.mxu0 0
  %56 = vmatpush.bf16.msra.mxu0 0
  %57 = vmatpush.bf16.msra.mxu0 %v44
  %58 = vmatpush.bf16.msra.mxu0 %v43
  %59 = vmatmul.bf16.gmra.mxu0 %v49
  %v60 = vpop.f32.mrf.mxu0
  %v61 = vadd.f32 0.0, %v60
  %v62 = vpop.f32.mrf.mxu0
  %v63 = vadd.f32 0.0, %v62
  %64 = vdwg.mxu0
  %v65 = vadd.f32 %v22, %v61
  %v66 = vadd.f32 %v23, %v63
  %67 = vst.msk [vmem:[#allocation2] sm:$0xff] %vm47, %v65
  %68 = vst.msk [vmem:[#allocation2 + $0x8] sm:$0xff] %vm47, %v66
  // Predicated region
  $region18: #{closed_call.15} parent=0 // pred_check
    %p69 = pneg %p15
  $region19: #{closed_call.15} parent=0 // pred_check_branch
    %71 = sbr.rel (%p69) target = $region21
  $region20: #{closed_call.15} parent=0 // pred_region
    %v72 = vld [vmem:[#allocation2] sm:$0xff]
    %v73 = vld [vmem:[#allocation2 + $0x8] sm:$0xff]
    %v74 = vld [vmem:[%s2] sm:$0xf]
    %v75 = vld [vmem:[%s2 + $0x4] sm:$0xf]
    %v76 = vunpack.c.l.bf16 %v74
    %v77 = vunpack.c.l.bf16 %v75
    %v78 = vadd.f32 %v72, %v76
    %v79 = vadd.f32 %v73, %v77
    %v80 = vpack.c.bf16 %v78, %v78
    %v81 = vpack.c.bf16 %v79, %v79
    %vm82 = vcmask 257024
    %83 = vst.msk [vmem:[%s3] sm:$0xf] %vm82, %v80
    %84 = vst.msk [vmem:[%s3 + $0x4] sm:$0xf] %vm82, %v81
  $region21: #{closed_call.15} parent=0 // pred_fallthru
    _
  // Predicated region
  $region22: #{closed_call.15} parent=0 // pred_check
    _
  $region23: #{closed_call.15} parent=0 // pred_check_branch
    %86 = sbr.rel (0) target = $region25
  $region24: #{closed_call.15} parent=0 // pred_region
    _
  $region25: #{closed_call.15} parent=0 // pred_fallthru
    _
  // Predicated region
  $region26: #{closed_call.15} parent=0 // pred_check
    _
  $region27: #{closed_call.15} parent=0 // pred_check_branch
    %88 = sbr.rel (0) target = $region29
  $region28: #{closed_call.15} parent=0 // pred_region
    _
  $region29: #{closed_call.15} parent=0 // pred_fallthru
    _

// kernel: closed_call.14
$region0: #{closed_call.14}
  #allocation0 [shape = 'u32[]', space=smem, size = 0x4, offset = 0x4, fixed_abs, tag = 'smem constant byte address 0x4 - core index']
  #allocation1 [shape = 'u32[72,128]{1,0:T(1,128)}', space=vmem, size = 0x9000, scoped, tag = 'internal scratch']
  #allocation2 [shape = 'f32[4,8,1]{2,1,0:T(8,128)}', space=vmem, size = 0x4000, scoped, tag = 'scratch operand']
  #allocation3 [shape = 'f32[4,8,1]{2,1,0:T(8,128)}', space=vmem, size = 0x4000, scoped, tag = 'scratch operand']
  #allocation4 [shape = 'f32[4,8,8]{2,1,0:T(8,128)}', space=vmem, size = 0x4000, scoped, tag = 'scratch operand']
  %s0 = inlined_call_operand.vmem [shape: bf16[2,4,8,8], index: 0, kind: input, shape index: {}]
  %s1 = inlined_call_operand.vmem [shape: bf16[2,4,8,8], index: 1, kind: input, shape index: {}]
  %s2 = inlined_call_operand.vmem [shape: bf16[2,4,8,8], index: 2, kind: input, shape index: {}]
  %s3 = inlined_call_operand.vmem [shape: bf16[2,8,8], index: 3, kind: input, shape index: {}]
  %s4 = inlined_call_operand.vmem [shape: bf16[2,4,8,8], index: 4, kind: output, shape index: {}]
  %s5 = sld [smem:[#allocation0]]
  $region57: #{closed_call.14} parent=0
    _
  %s7 = ssub.s32 1, %s5
  %s8 = scalar_select 0, %s7, %s5
  loop: start=0, step=1, limit=4
  $region2: #{closed_call.14} parent=0 // loop_pre_header
    _
  $region3: #{closed_call.14} parent=0 // loop_header
    %s10 = sphi 0, %s14
    %p11 = scmp.ge.s32.totalorder %s10, 4
    %s17 = sphi 0, %s43
    %s18 = sphi 0, %s39
    %s19 = sphi 0, %s35
    %s20 = sphi 0, %s31
    %s21 = sphi 0, %s17
    %s22 = sphi 0, %s18
    %s23 = sphi 0, %s19
    %s24 = sphi 0, %s20
    %s25 = sphi 0, %s21
    %s26 = sphi 0, %s22
    %s27 = sphi 0, %s23
    %s28 = sphi 0, %s24
    %s50 = sphi 0, %s52
    %s53 = sphi 0, %s50
    %s54 = sphi 0, %s53
    %s70 = sphi 0, %s54
    %s80 = sphi 0, %s82
    %s83 = sphi 0, %s80
    %s84 = sphi 0, %s83
    %s100 = sphi 0, %s84
    %s110 = sphi 0, %s112
    %s113 = sphi 0, %s110
    %s114 = sphi 0, %s113
    %s130 = sphi 0, %s114
    %s140 = sphi 0, %s142
    %s143 = sphi 0, %s140
    %s144 = sphi 0, %s143
    %s160 = sphi 0, %s144
    %s170 = sphi 0, %s172
    %s173 = sphi 0, %s170
    %s174 = sphi 0, %s173
    %s190 = sphi 0, %s174
  $region4: #{closed_call.14} parent=0 // loop_header_branch
    %13 = sbr.rel (%p11) target = $region8
  $region5: #{closed_call.14} parent=0 // loop_body
    %s15 = ssub.s32 %s10, 1
    %s16 = ssub.s32 %s10, 2
    %s29 = sadd.s32 1, %s20
    %p30 = scmp.ge.s32.totalorder %s29, 1
    %s31 = scalar_select %p30, 0, %s29
    %s32 = sadd.s32 1, %s19
    %s33 = scalar_select %p30, %s32, %s19
    %p34 = scmp.ge.s32.totalorder %s33, 1
    %s35 = scalar_select %p34, 0, %s33
    %s36 = sadd.s32 1, %s18
    %s37 = scalar_select %p34, %s36, %s18
    %p38 = scmp.ge.s32.totalorder %s37, 1
    %s39 = scalar_select %p38, 0, %s37
    %s40 = sadd.s32 1, %s17
    %s41 = scalar_select %p38, %s40, %s17
    %p42 = scmp.ge.s32.totalorder %s41, 2
    %s43 = scalar_select %p42, 0, %s41
    %s44 = ssub.s32 %s17, %s43
    %s45 = ssub.s32 %s18, %s39
    %s46 = sor.u32 %s44, %s45
    %s47 = ssub.s32 %s19, %s35
    %s48 = sor.u32 %s46, %s47
    %p49 = scmp.eq.s32.totalorder %s48, 0
    %s51 = sadd.s32 %s50, 1
    %s52 = scalar_select %p49, %s50, %s51
    %p55 = pneg %p49
    %p56 = scmp.eq.s32.totalorder %s10, 1
    %p57 = por %p55, %p56
    %p58 = scmp.ne.s32.totalorder %s50, %s53
    %p59 = scmp.eq.s32.totalorder %s10, 0
    %p60 = por %p58, %p59
    %p61 = scmp.ne.s32.totalorder %s50, %s53
    %p62 = scmp.eq.s32.totalorder %s15, 1
    %p63 = por %p61, %p62
    %p64 = scmp.ne.s32.totalorder %s53, %s54
    %p65 = scmp.eq.s32.totalorder %s15, 0
    %p66 = por %p64, %p65
    %p67 = scmp.ne.s32.totalorder %s53, %s54
    %p68 = scmp.eq.s32.totalorder %s16, 1
    %p69 = por %p67, %p68
    %p71 = scmp.ne.s32.totalorder %s54, %s70
    %p72 = scmp.eq.s32.totalorder %s16, 0
    %p73 = por %p71, %p72
    %s74 = ssub.s32 %s17, %s43
    %s75 = ssub.s32 %s18, %s39
    %s76 = sor.u32 %s74, %s75
    %s77 = ssub.s32 %s20, %s31
    %s78 = sor.u32 %s76, %s77
    %p79 = scmp.eq.s32.totalorder %s78, 0
    %s81 = sadd.s32 %s80, 1
    %s82 = scalar_select %p79, %s80, %s81
    %p85 = pneg %p79
    %p86 = scmp.eq.s32.totalorder %s10, 1
    %p87 = por %p85, %p86
    %p88 = scmp.ne.s32.totalorder %s80, %s83
    %p89 = scmp.eq.s32.totalorder %s10, 0
    %p90 = por %p88, %p89
    %p91 = scmp.ne.s32.totalorder %s80, %s83
    %p92 = scmp.eq.s32.totalorder %s15, 1
    %p93 = por %p91, %p92
    %p94 = scmp.ne.s32.totalorder %s83, %s84
    %p95 = scmp.eq.s32.totalorder %s15, 0
    %p96 = por %p94, %p95
    %p97 = scmp.ne.s32.totalorder %s83, %s84
    %p98 = scmp.eq.s32.totalorder %s16, 1
    %p99 = por %p97, %p98
    %p101 = scmp.ne.s32.totalorder %s84, %s100
    %p102 = scmp.eq.s32.totalorder %s16, 0
    %p103 = por %p101, %p102
    %s104 = ssub.s32 %s17, %s43
    %s105 = ssub.s32 %s18, %s39
    %s106 = sor.u32 %s104, %s105
    %s107 = ssub.s32 %s20, %s31
    %s108 = sor.u32 %s106, %s107
    %p109 = scmp.eq.s32.totalorder %s108, 0
    %s111 = sadd.s32 %s110, 1
    %s112 = scalar_select %p109, %s110, %s111
    %p115 = pneg %p109
    %p116 = scmp.eq.s32.totalorder %s10, 1
    %p117 = por %p115, %p116
    %p118 = scmp.ne.s32.totalorder %s110, %s113
    %p119 = scmp.eq.s32.totalorder %s10, 0
    %p120 = por %p118, %p119
    %p121 = scmp.ne.s32.totalorder %s110, %s113
    %p122 = scmp.eq.s32.totalorder %s15, 1
    %p123 = por %p121, %p122
    %p124 = scmp.ne.s32.totalorder %s113, %s114
    %p125 = scmp.eq.s32.totalorder %s15, 0
    %p126 = por %p124, %p125
    %p127 = scmp.ne.s32.totalorder %s113, %s114
    %p128 = scmp.eq.s32.totalorder %s16, 1
    %p129 = por %p127, %p128
    %p131 = scmp.ne.s32.totalorder %s114, %s130
    %p132 = scmp.eq.s32.totalorder %s16, 0
    %p133 = por %p131, %p132
    %s134 = ssub.s32 %s17, %s43
    %s135 = ssub.s32 %s19, %s35
    %s136 = sor.u32 %s134, %s135
    %s137 = ssub.s32 %s20, %s31
    %s138 = sor.u32 %s136, %s137
    %p139 = scmp.eq.s32.totalorder %s138, 0
    %s141 = sadd.s32 %s140, 1
    %s142 = scalar_select %p139, %s140, %s141
    %p145 = pneg %p139
    %p146 = scmp.eq.s32.totalorder %s10, 1
    %p147 = por %p145, %p146
    %p148 = scmp.ne.s32.totalorder %s140, %s143
    %p149 = scmp.eq.s32.totalorder %s10, 0
    %p150 = por %p148, %p149
    %p151 = scmp.ne.s32.totalorder %s140, %s143
    %p152 = scmp.eq.s32.totalorder %s15, 1
    %p153 = por %p151, %p152
    %p154 = scmp.ne.s32.totalorder %s143, %s144
    %p155 = scmp.eq.s32.totalorder %s15, 0
    %p156 = por %p154, %p155
    %p157 = scmp.ne.s32.totalorder %s143, %s144
    %p158 = scmp.eq.s32.totalorder %s16, 1
    %p159 = por %p157, %p158
    %p161 = scmp.ne.s32.totalorder %s144, %s160
    %p162 = scmp.eq.s32.totalorder %s16, 0
    %p163 = por %p161, %p162
    %s164 = ssub.s32 %s17, %s43
    %s165 = ssub.s32 %s18, %s39
    %s166 = sor.u32 %s164, %s165
    %s167 = ssub.s32 %s19, %s35
    %s168 = sor.u32 %s166, %s167
    %p169 = scmp.eq.s32.totalorder %s168, 0
    %s171 = sadd.s32 %s170, 1
    %s172 = scalar_select %p169, %s170, %s171
    %p175 = pneg %p169
    %p176 = scmp.eq.s32.totalorder %s10, 1
    %p177 = por %p175, %p176
    %p178 = scmp.ne.s32.totalorder %s170, %s173
    %p179 = scmp.eq.s32.totalorder %s10, 0
    %p180 = por %p178, %p179
    %p181 = scmp.ne.s32.totalorder %s170, %s173
    %p182 = scmp.eq.s32.totalorder %s15, 1
    %p183 = por %p181, %p182
    %p184 = scmp.ne.s32.totalorder %s173, %s174
    %p185 = scmp.eq.s32.totalorder %s15, 0
    %p186 = por %p184, %p185
    %p187 = scmp.ne.s32.totalorder %s173, %s174
    %p188 = scmp.eq.s32.totalorder %s16, 1
    %p189 = por %p187, %p188
    %p191 = scmp.ne.s32.totalorder %s174, %s190
    %p192 = scmp.eq.s32.totalorder %s16, 0
    %p193 = por %p191, %p192
    %p194 = scmp.le.s32.totalorder 1, %s10
    %p195 = scmp.lt.s32.totalorder %s10, 3
    %p196 = pnand %p194, %p195
    %p197 = pneg %p196
    // Predicated region
    $region9: #{closed_call.14} parent=5 // pred_check
      _
    $region10: #{closed_call.14} parent=5 // pred_check_branch
      %199 = sbr.rel (%p196) target = $region12
    $region11: #{closed_call.14} parent=5 // pred_region
      %s200 = ssub.s32 %s10, 1
    $region12: #{closed_call.14} parent=5 // pred_fallthru
      _
    %p201 = scmp.lt.s32.totalorder %s10, 2
    // Predicated region
    $region13: #{closed_call.14} parent=5 // pred_check
      %p202 = pneg %p201
    $region14: #{closed_call.14} parent=5 // pred_check_branch
      %204 = sbr.rel (%p202) target = $region16
    $region15: #{closed_call.14} parent=5 // pred_region
      // Predicated region
      $region17: #{closed_call.14} parent=15 // pred_check
        %p205 = pneg %p60
      $region18: #{closed_call.14} parent=15 // pred_check_branch
        %207 = sbr.rel (%p205) target = $region20
      $region19: #{closed_call.14} parent=15 // pred_region
        %s208 = smul.u32 4, %s18
        %p209 = scmp.lt.s32.totalorder %s17, 1
        %s210 = scalar_select %p209, %s17, 1
        %p211 = scmp.lt.s32.totalorder %s208, 3
        %s212 = scalar_select %p211, %s208, 3
        %p213 = scmp.lt.s32.totalorder %s19, 0
        %s214 = scalar_select %p213, %s19, 0
        %s215 = sadd.s32 %s214, %s212
        %s216 = smul.addr %s210, 4
        %s217 = sadd.s32 %s215, %s216
        %s218 = smul.addr %s217, 4
        %s219 = scalar_lea.vmem %s0, %s218
        %s220 = smul.u32 4, %s18
      $region20: #{closed_call.14} parent=15 // pred_fallthru
        _
      // Predicated region
      $region21: #{closed_call.14} parent=15 // pred_check
        %p221 = pneg %p90
      $region22: #{closed_call.14} parent=15 // pred_check_branch
        %223 = sbr.rel (%p221) target = $region24
      $region23: #{closed_call.14} parent=15 // pred_region
        %s224 = smul.u32 4, %s18
        %p225 = scmp.lt.s32.totalorder %s17, 1
        %s226 = scalar_select %p225, %s17, 1
        %p227 = scmp.lt.s32.totalorder %s224, 3
        %s228 = scalar_select %p227, %s224, 3
        %p229 = scmp.lt.s32.totalorder %s20, 0
        %s230 = scalar_select %p229, %s20, 0
        %s231 = sadd.s32 %s230, %s228
        %s232 = smul.addr %s226, 4
        %s233 = sadd.s32 %s231, %s232
        %s234 = smul.addr %s233, 4
        %s235 = scalar_lea.vmem %s1, %s234
        %s236 = smul.u32 4, %s18
      $region24: #{closed_call.14} parent=15 // pred_fallthru
        _
      // Predicated region
      $region25: #{closed_call.14} parent=15 // pred_check
        %p237 = pneg %p120
      $region26: #{closed_call.14} parent=15 // pred_check_branch
        %239 = sbr.rel (%p237) target = $region28
      $region27: #{closed_call.14} parent=15 // pred_region
        %s240 = smul.u32 4, %s18
        %p241 = scmp.lt.s32.totalorder %s17, 1
        %s242 = scalar_select %p241, %s17, 1
        %p243 = scmp.lt.s32.totalorder %s240, 3
        %s244 = scalar_select %p243, %s240, 3
        %p245 = scmp.lt.s32.totalorder %s20, 0
        %s246 = scalar_select %p245, %s20, 0
        %s247 = sadd.s32 %s246, %s244
        %s248 = smul.addr %s242, 4
        %s249 = sadd.s32 %s247, %s248
        %s250 = smul.addr %s249, 4
        %s251 = scalar_lea.vmem %s2, %s250
        %s252 = smul.u32 4, %s18
      $region28: #{closed_call.14} parent=15 // pred_fallthru
        _
      // Predicated region
      $region29: #{closed_call.14} parent=15 // pred_check
        %p253 = pneg %p150
      $region30: #{closed_call.14} parent=15 // pred_check_branch
        %255 = sbr.rel (%p253) target = $region32
      $region31: #{closed_call.14} parent=15 // pred_region
        %p256 = scmp.lt.s32.totalorder %s17, 1
        %s257 = scalar_select %p256, %s17, 1
        %p258 = scmp.lt.s32.totalorder %s19, 0
        %s259 = scalar_select %p258, %s19, 0
        %p260 = scmp.lt.s32.totalorder %s20, 0
        %s261 = scalar_select %p260, %s20, 0
        %s262 = sadd.s32 %s261, %s259
        %s263 = sadd.s32 %s262, %s257
        %s264 = smul.addr %s263, 4
        %s265 = scalar_lea.vmem %s3, %s264
      $region32: #{closed_call.14} parent=15 // pred_fallthru
        _
    $region16: #{closed_call.14} parent=5 // pred_fallthru
      _
    %p266 = scmp.le.s32.totalorder 1, %s10
    %p267 = scmp.lt.s32.totalorder %s10, 3
    %p268 = pnand %p266, %p267
    %p269 = pneg %p268
    // Predicated region
    $region33: #{closed_call.14} parent=5 // pred_check
      _
    $region34: #{closed_call.14} parent=5 // pred_check_branch
      %271 = sbr.rel (%p268) target = $region36
    $region35: #{closed_call.14} parent=5 // pred_region
      %s272 = ssub.s32 %s10, 1
      %s273 = smul.u32 4, %s22
      %p274 = scmp.lt.s32.totalorder %s21, 1
      %s275 = scalar_select %p274, %s21, 1
      %p276 = scmp.lt.s32.totalorder %s273, 3
      %s277 = scalar_select %p276, %s273, 3
      %p278 = scmp.lt.s32.totalorder %s23, 0
      %s279 = scalar_select %p278, %s23, 0
      %s280 = sadd.s32 %s279, %s277
      %s281 = smul.addr %s275, 4
      %s282 = sadd.s32 %s280, %s281
      %s283 = smul.addr %s282, 4
      %s284 = scalar_lea.vmem %s0, %s283
      %p285 = pneg %p66
      %p286 = pneg %p63
      %s287 = smul.u32 4, %s22
      %p288 = scmp.lt.s32.totalorder %s21, 1
      %s289 = scalar_select %p288, %s21, 1
      %p290 = scmp.lt.s32.totalorder %s287, 3
      %s291 = scalar_select %p290, %s287, 3
      %p292 = scmp.lt.s32.totalorder %s24, 0
      %s293 = scalar_select %p292, %s24, 0
      %s294 = sadd.s32 %s293, %s291
      %s295 = smul.addr %s289, 4
      %s296 = sadd.s32 %s294, %s295
      %s297 = smul.addr %s296, 4
      %s298 = scalar_lea.vmem %s1, %s297
      %p299 = pneg %p96
      %p300 = pneg %p93
      %s301 = smul.u32 4, %s22
      %p302 = scmp.lt.s32.totalorder %s21, 1
      %s303 = scalar_select %p302, %s21, 1
      %p304 = scmp.lt.s32.totalorder %s301, 3
      %s305 = scalar_select %p304, %s301, 3
      %p306 = scmp.lt.s32.totalorder %s24, 0
      %s307 = scalar_select %p306, %s24, 0
      %s308 = sadd.s32 %s307, %s305
      %s309 = smul.addr %s303, 4
      %s310 = sadd.s32 %s308, %s309
      %s311 = smul.addr %s310, 4
      %s312 = scalar_lea.vmem %s2, %s311
      %p313 = pneg %p126
      %p314 = pneg %p123
      %p315 = scmp.lt.s32.totalorder %s21, 1
      %s316 = scalar_select %p315, %s21, 1
      %p317 = scmp.lt.s32.totalorder %s23, 0
      %s318 = scalar_select %p317, %s23, 0
      %p319 = scmp.lt.s32.totalorder %s24, 0
      %s320 = scalar_select %p319, %s24, 0
      %s321 = sadd.s32 %s320, %s318
      %s322 = sadd.s32 %s321, %s316
      %s323 = smul.addr %s322, 4
      %s324 = scalar_lea.vmem %s3, %s323
      %p325 = pneg %p156
      %p326 = pneg %p153
      %p327 = pneg %p186
      %p328 = pneg %p183
      %s329 = smul.u32 4, %s22
      %p330 = scmp.lt.s32.totalorder %s21, 1
      %s331 = scalar_select %p330, %s21, 1
      %p332 = scmp.lt.s32.totalorder %s329, 3
      %s333 = scalar_select %p332, %s329, 3
      %p334 = scmp.lt.s32.totalorder %s23, 0
      %s335 = scalar_select %p334, %s23, 0
      %s336 = sadd.s32 %s335, %s333
      %s337 = smul.addr %s331, 4
      %s338 = sadd.s32 %s336, %s337
      %s339 = smul.addr %s338, 4
      %s340 = scalar_lea.vmem %s4, %s339
      %s341 = smul.u32 4, %s22
      %p342 = scmp.lt.s32.totalorder %s21, 1
      %s343 = scalar_select %p342, %s21, 1
      %p344 = scmp.lt.s32.totalorder %s341, 3
      %s345 = scalar_select %p344, %s341, 3
      %p346 = scmp.lt.s32.totalorder %s23, 0
      %s347 = scalar_select %p346, %s23, 0
      %s348 = sadd.s32 %s347, %s345
      %s349 = smul.addr %s343, 4
      %s350 = sadd.s32 %s348, %s349
      %s351 = smul.addr %s350, 4
      %s352 = scalar_lea.vmem %s0, %s351
      %s353 = smul.u32 4, %s22
      %s354 = smul.u32 4, %s22
      %p355 = scmp.lt.s32.totalorder %s21, 1
      %s356 = scalar_select %p355, %s21, 1
      %p357 = scmp.lt.s32.totalorder %s354, 3
      %s358 = scalar_select %p357, %s354, 3
      %p359 = scmp.lt.s32.totalorder %s24, 0
      %s360 = scalar_select %p359, %s24, 0
      %s361 = sadd.s32 %s360, %s358
      %s362 = smul.addr %s356, 4
      %s363 = sadd.s32 %s361, %s362
      %s364 = smul.addr %s363, 4
      %s365 = scalar_lea.vmem %s1, %s364
      %s366 = smul.u32 4, %s22
      %s367 = smul.u32 4, %s22
      %p368 = scmp.lt.s32.totalorder %s21, 1
      %s369 = scalar_select %p368, %s21, 1
      %p370 = scmp.lt.s32.totalorder %s367, 3
      %s371 = scalar_select %p370, %s367, 3
      %p372 = scmp.lt.s32.totalorder %s24, 0
      %s373 = scalar_select %p372, %s24, 0
      %s374 = sadd.s32 %s373, %s371
      %s375 = smul.addr %s369, 4
      %s376 = sadd.s32 %s374, %s375
      %s377 = smul.addr %s376, 4
      %s378 = scalar_lea.vmem %s2, %s377
      %s379 = smul.u32 4, %s22
      %p380 = scmp.lt.s32.totalorder %s21, 1
      %s381 = scalar_select %p380, %s21, 1
      %p382 = scmp.lt.s32.totalorder %s23, 0
      %s383 = scalar_select %p382, %s23, 0
      %p384 = scmp.lt.s32.totalorder %s24, 0
      %s385 = scalar_select %p384, %s24, 0
      %s386 = sadd.s32 %s385, %s383
      %s387 = sadd.s32 %s386, %s381
      %s388 = smul.addr %s387, 4
      %s389 = scalar_lea.vmem %s3, %s388
      %s390 = smul.u32 4, %s22
      %p391 = scmp.lt.s32.totalorder %s21, 1
      %s392 = scalar_select %p391, %s21, 1
      %p393 = scmp.lt.s32.totalorder %s390, 3
      %s394 = scalar_select %p393, %s390, 3
      %p395 = scmp.lt.s32.totalorder %s23, 0
      %s396 = scalar_select %p395, %s23, 0
      %s397 = sadd.s32 %s396, %s394
      %s398 = smul.addr %s392, 4
      %s399 = sadd.s32 %s397, %s398
      %s400 = smul.addr %s399, 4
      %s401 = scalar_lea.vmem %s4, %s400
      %s402 = smul.u32 4, %s22
      %p404 = scmp.eq.s32.totalorder %s24, 0
      // Predicated region
      $region37: #{closed_call.14} parent=35 // pred_check
        %p405 = pneg %p404
      $region38: #{closed_call.14} parent=35 // pred_check_branch
        %407 = sbr.rel (%p405) target = $region40
      $region39: #{closed_call.14} parent=35 // pred_region
        %vm408 = vcmask 7168
        %409 = vst.msk [vmem:[#allocation2] sm:$0xff] %vm408, -inf
        %410 = vst.msk [vmem:[#allocation2 + $0x8] sm:$0xff] %vm408, -inf
        %411 = vst.msk [vmem:[#allocation2 + $0x10] sm:$0xff] %vm408, -inf
        %412 = vst.msk [vmem:[#allocation2 + $0x18] sm:$0xff] %vm408, -inf
        %413 = vst.msk [vmem:[#allocation3] sm:$0xff] %vm408, 0.0
        %414 = vst.msk [vmem:[#allocation3 + $0x8] sm:$0xff] %vm408, 0.0
        %415 = vst.msk [vmem:[#allocation3 + $0x10] sm:$0xff] %vm408, 0.0
        %416 = vst.msk [vmem:[#allocation3 + $0x18] sm:$0xff] %vm408, 0.0
        %vm417 = vcmask 64512
        %418 = vst.msk [vmem:[#allocation4] sm:$0xff] %vm417, 0.0
        %419 = vst.msk [vmem:[#allocation4 + $0x8] sm:$0xff] %vm417, 0.0
        %420 = vst.msk [vmem:[#allocation4 + $0x10] sm:$0xff] %vm417, 0.0
        %421 = vst.msk [vmem:[#allocation4 + $0x18] sm:$0xff] %vm417, 0.0
      $region40: #{closed_call.14} parent=35 // pred_fallthru
        _
      %v422 = vld [vmem:[%s352] sm:$0xf]
      %v423 = vld [vmem:[%s352 + $0x4] sm:$0xf]
      %v424 = vld [vmem:[%s352 + $0x8] sm:$0xf]
      %v425 = vld [vmem:[%s352 + $0xc] sm:$0xf]
      %v426 = vld [vmem:[%s365] sm:$0xf]
      %v427 = vld [vmem:[%s365 + $0x4] sm:$0xf]
      %v428 = vld [vmem:[%s365 + $0x8] sm:$0xf]
      %v429 = vld [vmem:[%s365 + $0xc] sm:$0xf]
      %v430 = vld [vmem:[%s378] sm:$0xf]
      %v431 = vld [vmem:[%s378 + $0x4] sm:$0xf]
      %v432 = vld [vmem:[%s378 + $0x8] sm:$0xf]
      %v433 = vld [vmem:[%s378 + $0xc] sm:$0xf]
      %vm434 = vcmask 64512
      %v436 = vsel %vm434, %v422, 0
      %v439 = vsel %vm434, %v426, 0
      %441 = vmatpush.bf16.xpose.msra.mxu0 0
      %442 = vmatpush.bf16.xpose.msra.mxu0 0
      %443 = vmatpush.bf16.xpose.msra.mxu0 0
      %444 = vmatpush.bf16.xpose.msra.mxu0 0
      %445 = vmatpush.bf16.xpose.msra.mxu0 0
      %446 = vmatpush.bf16.xpose.msra.mxu0 0
      %447 = vmatpush.bf16.xpose.msra.mxu0 0
      %448 = vmatpush.bf16.xpose.msra.mxu0 %v439
      %449 = vmatmul.bf16.gmra.mxu0 %v436
      %v450 = vpop.f32.mrf.mxu0
      %v451 = vadd.f32 0.0, %v450
      %v452 = vpop.f32.mrf.mxu0
      %453 = vdwg.mxu0
      %v455 = vsel %vm434, %v423, 0
      %v458 = vsel %vm434, %v427, 0
      %460 = vmatpush.bf16.xpose.msra.mxu0 0
      %461 = vmatpush.bf16.xpose.msra.mxu0 0
      %462 = vmatpush.bf16.xpose.msra.mxu0 0
      %463 = vmatpush.bf16.xpose.msra.mxu0 0
      %464 = vmatpush.bf16.xpose.msra.mxu0 0
      %465 = vmatpush.bf16.xpose.msra.mxu0 0
      %466 = vmatpush.bf16.xpose.msra.mxu0 0
      %467 = vmatpush.bf16.xpose.msra.mxu0 %v458
      %468 = vmatmul.bf16.gmra.mxu0 %v455
      %v469 = vpop.f32.mrf.mxu0
      %v470 = vadd.f32 0.0, %v469
      %v471 = vpop.f32.mrf.mxu0
      %472 = vdwg.mxu0
      %v474 = vsel %vm434, %v424, 0
      %v477 = vsel %vm434, %v428, 0
      %479 = vmatpush.bf16.xpose.msra.mxu0 0
      %480 = vmatpush.bf16.xpose.msra.mxu0 0
      %481 = vmatpush.bf16.xpose.msra.mxu0 0
      %482 = vmatpush.bf16.xpose.msra.mxu0 0
      %483 = vmatpush.bf16.xpose.msra.mxu0 0
      %484 = vmatpush.bf16.xpose.msra.mxu0 0
      %485 = vmatpush.bf16.xpose.msra.mxu0 0
      %486 = vmatpush.bf16.xpose.msra.mxu0 %v477
      %487 = vmatmul.bf16.gmra.mxu0 %v474
      %v488 = vpop.f32.mrf.mxu0
      %v489 = vadd.f32 0.0, %v488
      %v490 = vpop.f32.mrf.mxu0
      %491 = vdwg.mxu0
      %v493 = vsel %vm434, %v425, 0
      %v496 = vsel %vm434, %v429, 0
      %498 = vmatpush.bf16.xpose.msra.mxu0 0
      %499 = vmatpush.bf16.xpose.msra.mxu0 0
      %500 = vmatpush.bf16.xpose.msra.mxu0 0
      %501 = vmatpush.bf16.xpose.msra.mxu0 0
      %502 = vmatpush.bf16.xpose.msra.mxu0 0
      %503 = vmatpush.bf16.xpose.msra.mxu0 0
      %504 = vmatpush.bf16.xpose.msra.mxu0 0
      %505 = vmatpush.bf16.xpose.msra.mxu0 %v496
      %506 = vmatmul.bf16.gmra.mxu0 %v493
      %v507 = vpop.f32.mrf.mxu0
      %v508 = vadd.f32 0.0, %v507
      %v509 = vpop.f32.mrf.mxu0
      %510 = vdwg.mxu0
      %v511 = vmul.f32 %v451, 0.35355338
      %v512 = vmul.f32 %v470, 0.35355338
      %v513 = vmul.f32 %v489, 0.35355338
      %v514 = vmul.f32 %v508, 0.35355338
      %v515 = vld [vmem:[%s389] sm:$0xf]
      %v516 = vunpack.c.l.bf16 %v515
      %vm517 = vcmp.gt.f32.partialorder %v516, 0.0
      %v518 = vsel %vm517, 0.0, -1e+30
      %v519 = vadd.f32 %v511, %v518
      %v520 = vadd.f32 %v512, %v518
      %v521 = vadd.f32 %v513, %v518
      %v522 = vadd.f32 %v514, %v518
      %v523 = vld [vmem:[#allocation2] sm:$0xff]
      %v524 = vld [vmem:[#allocation2 + $0x8] sm:$0xff]
      %v525 = vld [vmem:[#allocation2 + $0x10] sm:$0xff]
      %v526 = vld [vmem:[#allocation2 + $0x18] sm:$0xff]
      %v527 = vsel %vm434, %v519, -inf
      %528 = vmax.xlane.f32.xlu0 %v527
      %v529 = vpop.xlane.xlu0 %528
      %v530 = vsel %vm434, %v520, -inf
      %531 = vmax.xlane.f32.xlu0 %v530
      %v532 = vpop.xlane.xlu0 %531
      %v533 = vsel %vm434, %v521, -inf
      %534 = vmax.xlane.f32.xlu0 %v533
      %v535 = vpop.xlane.xlu0 %534
      %v536 = vsel %vm434, %v522, -inf
      %537 = vmax.xlane.f32.xlu0 %v536
      %v538 = vpop.xlane.xlu0 %537
      %v539 = vmax.f32 %v523, %v529
      %v540 = vmax.f32 %v524, %v532
      %v541 = vmax.f32 %v525, %v535
      %v542 = vmax.f32 %v526, %v538
      %v543 = vsub.f32 %v523, %v539
      %v544 = vsub.f32 %v524, %v540
      %v545 = vsub.f32 %v525, %v541
      %v546 = vsub.f32 %v526, %v542
      %v547 = vmul.f32 %v543, 1.442695
      %v548 = vpow.pop %v547
      %v549 = vmul.f32 %v544, 1.442695
      %v550 = vpow.pop %v549
      %v551 = vmul.f32 %v545, 1.442695
      %v552 = vpow.pop %v551
      %v553 = vmul.f32 %v546, 1.442695
      %v554 = vpow.pop %v553
      %556 = vset.pattern.permute.xlu0 0
      %557 = vperm.xlu0 %556, %v539
      %v558 = vpop.permute.xlu0 %557
      %561 = vset.pattern.permute.xlu0 0
      %562 = vperm.xlu0 %561, %v540
      %v563 = vpop.permute.xlu0 %562
      %566 = vset.pattern.permute.xlu0 0
      %567 = vperm.xlu0 %566, %v541
      %v568 = vpop.permute.xlu0 %567
      %571 = vset.pattern.permute.xlu0 0
      %572 = vperm.xlu0 %571, %v542
      %v573 = vpop.permute.xlu0 %572
      %v575 = vsub.f32 %v519, %v558
      %v576 = vsub.f32 %v520, %v563
      %v577 = vsub.f32 %v521, %v568
      %v578 = vsub.f32 %v522, %v573
      %v579 = vmul.f32 %v575, 1.442695
      %v580 = vpow.pop %v579
      %v581 = vmul.f32 %v576, 1.442695
      %v582 = vpow.pop %v581
      %v583 = vmul.f32 %v577, 1.442695
      %v584 = vpow.pop %v583
      %v585 = vmul.f32 %v578, 1.442695
      %v586 = vpow.pop %v585
      %v587 = vld [vmem:[#allocation3] sm:$0xff]
      %v588 = vld [vmem:[#allocation3 + $0x8] sm:$0xff]
      %v589 = vld [vmem:[#allocation3 + $0x10] sm:$0xff]
      %v590 = vld [vmem:[#allocation3 + $0x18] sm:$0xff]
      %v591 = vmul.f32 %v548, %v587
      %v592 = vmul.f32 %v550, %v588
      %v593 = vmul.f32 %v552, %v589
      %v594 = vmul.f32 %v554, %v590
      %v595 = vsel %vm434, %v580, 0.0
      %596 = vadd.xlane.f32.xlu0 %v595
      %v597 = vpop.xlane.xlu0 %596
      %v598 = vsel %vm434, %v582, 0.0
      %599 = vadd.xlane.f32.xlu0 %v598
      %v600 = vpop.xlane.xlu0 %599
      %v601 = vsel %vm434, %v584, 0.0
      %602 = vadd.xlane.f32.xlu0 %v601
      %v603 = vpop.xlane.xlu0 %602
      %v604 = vsel %vm434, %v586, 0.0
      %605 = vadd.xlane.f32.xlu0 %v604
      %v606 = vpop.xlane.xlu0 %605
      %v607 = vadd.f32 %v591, %v597
      %v608 = vadd.f32 %v592, %v600
      %v609 = vadd.f32 %v593, %v603
      %v610 = vadd.f32 %v594, %v606
      %vm611 = vcmask 7168
      %612 = vst.msk [vmem:[#allocation3] sm:$0xff] %vm611, %v607
      %613 = vst.msk [vmem:[#allocation3 + $0x8] sm:$0xff] %vm611, %v608
      %614 = vst.msk [vmem:[#allocation3 + $0x10] sm:$0xff] %vm611, %v609
      %615 = vst.msk [vmem:[#allocation3 + $0x18] sm:$0xff] %vm611, %v610
      %v616 = vld [vmem:[#allocation4] sm:$0xff]
      %v617 = vld [vmem:[#allocation4 + $0x8] sm:$0xff]
      %v618 = vld [vmem:[#allocation4 + $0x10] sm:$0xff]
      %v619 = vld [vmem:[#allocation4 + $0x18] sm:$0xff]
      %621 = vset.pattern.permute.xlu0 0
      %622 = vperm.xlu0 %621, %v548
      %v623 = vpop.permute.xlu0 %622
      %626 = vset.pattern.permute.xlu0 0
      %627 = vperm.xlu0 %626, %v550
      %v628 = vpop.permute.xlu0 %627
      %631 = vset.pattern.permute.xlu0 0
      %632 = vperm.xlu0 %631, %v552
      %v633 = vpop.permute.xlu0 %632
      %636 = vset.pattern.permute.xlu0 0
      %637 = vperm.xlu0 %636, %v554
      %v638 = vpop.permute.xlu0 %637
      %v640 = vmul.f32 %v623, %v616
      %v641 = vmul.f32 %v628, %v617
      %v642 = vmul.f32 %v633, %v618
      %v643 = vmul.f32 %v638, %v619
      %v644 = vpack.c.bf16 %v580, %v580
      %v645 = vpack.c.bf16 %v582, %v582
      %v646 = vpack.c.bf16 %v584, %v584
      %v647 = vpack.c.bf16 %v586, %v586
      %v649 = vsel %vm434, %v644, 0
      %vm651 = vcmask 1043456
      %v653 = vsel %vm651, %v430, 0
      %655 = vmatpush.bf16.msra.mxu0 0
      %656 = vmatpush.bf16.msra.mxu0 0
      %657 = vmatpush.bf16.msra.mxu0 0
      %658 = vmatpush.bf16.msra.mxu0 0
      %659 = vmatpush.bf16.msra.mxu0 0
      %660 = vmatpush.bf16.msra.mxu0 0
      %661 = vmatpush.bf16.msra.mxu0 0
      %662 = vmatpush.bf16.msra.mxu0 %v653
      %663 = vmatmul.bf16.gmra.mxu0 %v649
      %v664 = vpop.f32.mrf.mxu0
      %v665 = vadd.f32 0.0, %v664
      %v666 = vpop.f32.mrf.mxu0
      %667 = vdwg.mxu0
      %v669 = vsel %vm434, %v645, 0
      %v672 = vsel %vm651, %v431, 0
      %674 = vmatpush.bf16.msra.mxu0 0
      %675 = vmatpush.bf16.msra.mxu0 0
      %676 = vmatpush.bf16.msra.mxu0 0
      %677 = vmatpush.bf16.msra.mxu0 0
      %678 = vmatpush.bf16.msra.mxu0 0
      %679 = vmatpush.bf16.msra.mxu0 0
      %680 = vmatpush.bf16.msra.mxu0 0
      %681 = vmatpush.bf16.msra.mxu0 %v672
      %682 = vmatmul.bf16.gmra.mxu0 %v669
      %v683 = vpop.f32.mrf.mxu0
      %v684 = vadd.f32 0.0, %v683
      %v685 = vpop.f32.mrf.mxu0
      %686 = vdwg.mxu0
      %v688 = vsel %vm434, %v646, 0
      %v691 = vsel %vm651, %v432, 0
      %693 = vmatpush.bf16.msra.mxu0 0
      %694 = vmatpush.bf16.msra.mxu0 0
      %695 = vmatpush.bf16.msra.mxu0 0
      %696 = vmatpush.bf16.msra.mxu0 0
      %697 = vmatpush.bf16.msra.mxu0 0
      %698 = vmatpush.bf16.msra.mxu0 0
      %699 = vmatpush.bf16.msra.mxu0 0
      %700 = vmatpush.bf16.msra.mxu0 %v691
      %701 = vmatmul.bf16.gmra.mxu0 %v688
      %v702 = vpop.f32.mrf.mxu0
      %v703 = vadd.f32 0.0, %v702
      %v704 = vpop.f32.mrf.mxu0
      %705 = vdwg.mxu0
      %v707 = vsel %vm434, %v647, 0
      %v710 = vsel %vm651, %v433, 0
      %712 = vmatpush.bf16.msra.mxu0 0
      %713 = vmatpush.bf16.msra.mxu0 0
      %714 = vmatpush.bf16.msra.mxu0 0
      %715 = vmatpush.bf16.msra.mxu0 0
      %716 = vmatpush.bf16.msra.mxu0 0
      %717 = vmatpush.bf16.msra.mxu0 0
      %718 = vmatpush.bf16.msra.mxu0 0
      %719 = vmatpush.bf16.msra.mxu0 %v710
      %720 = vmatmul.bf16.gmra.mxu0 %v707
      %v721 = vpop.f32.mrf.mxu0
      %v722 = vadd.f32 0.0, %v721
      %v723 = vpop.f32.mrf.mxu0
      %724 = vdwg.mxu0
      %v725 = vadd.f32 %v640, %v665
      %v726 = vadd.f32 %v641, %v684
      %v727 = vadd.f32 %v642, %v703
      %v728 = vadd.f32 %v643, %v722
      %729 = vst.msk [vmem:[#allocation4] sm:$0xff] %vm434, %v725
      %730 = vst.msk [vmem:[#allocation4 + $0x8] sm:$0xff] %vm434, %v726
      %731 = vst.msk [vmem:[#allocation4 + $0x10] sm:$0xff] %vm434, %v727
      %732 = vst.msk [vmem:[#allocation4 + $0x18] sm:$0xff] %vm434, %v728
      %733 = vst.msk [vmem:[#allocation2] sm:$0xff] %vm611, %v539
      %734 = vst.msk [vmem:[#allocation2 + $0x8] sm:$0xff] %vm611, %v540
      %735 = vst.msk [vmem:[#allocation2 + $0x10] sm:$0xff] %vm611, %v541
      %736 = vst.msk [vmem:[#allocation2 + $0x18] sm:$0xff] %vm611, %v542
      // Predicated region
      $region41: #{closed_call.14} parent=35 // pred_check
        %p737 = pneg %p404
      $region42: #{closed_call.14} parent=35 // pred_check_branch
        %739 = sbr.rel (%p737) target = $region44
      $region43: #{closed_call.14} parent=35 // pred_region
        %v740 = vld [vmem:[#allocation4] sm:$0xff]
        %v741 = vld [vmem:[#allocation4 + $0x8] sm:$0xff]
        %v742 = vld [vmem:[#allocation4 + $0x10] sm:$0xff]
        %v743 = vld [vmem:[#allocation4 + $0x18] sm:$0xff]
        %v744 = vld [vmem:[#allocation3] sm:$0xff]
        %v745 = vld [vmem:[#allocation3 + $0x8] sm:$0xff]
        %v746 = vld [vmem:[#allocation3 + $0x10] sm:$0xff]
        %v747 = vld [vmem:[#allocation3 + $0x18] sm:$0xff]
        %v748 = vrcp.pop %v744
        %v749 = vrcp.pop %v745
        %v750 = vrcp.pop %v746
        %v751 = vrcp.pop %v747
        %753 = vset.pattern.permute.xlu0 0
        %754 = vperm.xlu0 %753, %v748
        %v755 = vpop.permute.xlu0 %754
        %758 = vset.pattern.permute.xlu0 0
        %759 = vperm.xlu0 %758, %v749
        %v760 = vpop.permute.xlu0 %759
        %763 = vset.pattern.permute.xlu0 0
        %764 = vperm.xlu0 %763, %v750
        %v765 = vpop.permute.xlu0 %764
        %768 = vset.pattern.permute.xlu0 0
        %769 = vperm.xlu0 %768, %v751
        %v770 = vpop.permute.xlu0 %769
        %v772 = vmul.f32 %v740, %v755
        %v773 = vmul.f32 %v741, %v760
        %v774 = vmul.f32 %v742, %v765
        %v775 = vmul.f32 %v743, %v770
        %v776 = vpack.c.bf16 %v772, %v772
        %v777 = vpack.c.bf16 %v773, %v773
        %v778 = vpack.c.bf16 %v774, %v774
        %v779 = vpack.c.bf16 %v775, %v775
        %vm780 = vcmask 60416
        %781 = vst.msk [vmem:[%s401] sm:$0xf] %vm780, %v776
        %782 = vst.msk [vmem:[%s401 + $0x4] sm:$0xf] %vm780, %v777
        %783 = vst.msk [vmem:[%s401 + $0x8] sm:$0xf] %vm780, %v778
        %784 = vst.msk [vmem:[%s401 + $0xc] sm:$0xf] %vm780, %v779
      $region44: #{closed_call.14} parent=35 // pred_fallthru
        _
      %s785 = smul.u32 4, %s22
      %p786 = scmp.lt.s32.totalorder %s21, 1
      %s787 = scalar_select %p786, %s21, 1
      %p788 = scmp.lt.s32.totalorder %s785, 3
      %s789 = scalar_select %p788, %s785, 3
      %p790 = scmp.lt.s32.totalorder %s23, 0
      %s791 = scalar_select %p790, %s23, 0
      %s792 = sadd.s32 %s791, %s789
      %s793 = smul.addr %s787, 4
      %s794 = sadd.s32 %s792, %s793
      %s795 = smul.addr %s794, 4
      %s796 = scalar_lea.vmem %s4, %s795
      // Predicated region
      $region45: #{closed_call.14} parent=35 // pred_check
        %p797 = pneg %p183
      $region46: #{closed_call.14} parent=35 // pred_check_branch
        %799 = sbr.rel (%p797) target = $region48
      $region47: #{closed_call.14} parent=35 // pred_region
        %s800 = smul.u32 4, %s22
      $region48: #{closed_call.14} parent=35 // pred_fallthru
        _
    $region36: #{closed_call.14} parent=5 // pred_fallthru
      _
    %p801 = scmp.le.s32.totalorder 2, %s10
    // Predicated region
    $region49: #{closed_call.14} parent=5 // pred_check
      %p802 = pneg %p801
    $region50: #{closed_call.14} parent=5 // pred_check_branch
      %804 = sbr.rel (%p802) target = $region52
    $region51: #{closed_call.14} parent=5 // pred_region
      %s805 = ssub.s32 %s10, 2
      // Predicated region
      $region53: #{closed_call.14} parent=51 // pred_check
        %p806 = pneg %p189
      $region54: #{closed_call.14} parent=51 // pred_check_branch
        %808 = sbr.rel (%p806) target = $region56
      $region55: #{closed_call.14} parent=51 // pred_region
        %s809 = smul.u32 4, %s26
        %p810 = scmp.lt.s32.totalorder %s25, 1
        %s811 = scalar_select %p810, %s25, 1
        %p812 = scmp.lt.s32.totalorder %s809, 3
        %s813 = scalar_select %p812, %s809, 3
        %p814 = scmp.lt.s32.totalorder %s27, 0
        %s815 = scalar_select %p814, %s27, 0
        %s816 = sadd.s32 %s815, %s813
        %s817 = smul.addr %s811, 4
        %s818 = sadd.s32 %s816, %s817
        %s819 = smul.addr %s818, 4
        %s820 = scalar_lea.vmem %s4, %s819
      $region56: #{closed_call.14} parent=51 // pred_fallthru
        _
    $region52: #{closed_call.14} parent=5 // pred_fallthru
      _
  $region6: #{closed_call.14} parent=0 // loop_footer
    %s14 = sadd.s32 1, %s10
  $region7: #{closed_call.14} parent=0 // loop_footer_branch
    %9 = sbr.rel target = $region3
  $region8: #{closed_call.14} parent=0 // loop_exit
    _

// kernel: closed_call.16
$region0: #{closed_call.16}
  #allocation0 [shape = 'u32[]', space=smem, size = 0x4, offset = 0x4, fixed_abs, tag = 'smem constant byte address 0x4 - core index']
  #allocation1 [shape = 'u32[72,128]{1,0:T(1,128)}', space=vmem, size = 0x9000, scoped, tag = 'internal scratch']
  #allocation2 [shape = 'bf16[16,32]{1,0:T(8,128)(2,1)}', space=vmem, size = 0x1000, scoped, tag = 'scratch operand']
  #allocation3 [shape = 'f32[16,32]{1,0:T(8,128)}', space=vmem, size = 0x2000, scoped, tag = 'scratch operand']
  %s0 = inlined_call_operand.vmem [shape: bf16[16,32], index: 0, kind: input, shape index: {}]
  %s1 = inlined_call_operand.vmem [shape: bf16[1,32], index: 1, kind: input, shape index: {}]
  %s2 = inlined_call_operand.vmem [shape: bf16[32,64], index: 2, kind: input, shape index: {}]
  %s3 = inlined_call_operand.vmem [shape: bf16[32,64], index: 3, kind: input, shape index: {}]
  %s4 = inlined_call_operand.vmem [shape: bf16[64,32], index: 4, kind: input, shape index: {}]
  %s5 = inlined_call_operand.vmem [shape: bf16[16,32], index: 5, kind: output, shape index: {}]
  %s6 = sld [smem:[#allocation0]]
  $region38: #{closed_call.16} parent=0
    _
  %s8 = ssub.s32 1, %s6
  %s9 = scalar_select 0, %s8, %s6
  // Predicated region
  $region2: #{closed_call.16} parent=0 // pred_check
    _
  $region3: #{closed_call.16} parent=0 // pred_check_branch
    %11 = sbr.rel (0) target = $region5
  $region4: #{closed_call.16} parent=0 // pred_region
    _
  $region5: #{closed_call.16} parent=0 // pred_fallthru
    _
  // Predicated region
  $region6: #{closed_call.16} parent=0 // pred_check
    _
  $region7: #{closed_call.16} parent=0 // pred_check_branch
    %13 = sbr.rel (0) target = $region9
  $region8: #{closed_call.16} parent=0 // pred_region
    _
  $region9: #{closed_call.16} parent=0 // pred_fallthru
    _
  // Predicated region
  $region10: #{closed_call.16} parent=0 // pred_check
    _
  $region11: #{closed_call.16} parent=0 // pred_check_branch
    %15 = sbr.rel (0) target = $region13
  $region12: #{closed_call.16} parent=0 // pred_region
    _
  $region13: #{closed_call.16} parent=0 // pred_fallthru
    _
  // Predicated region
  $region14: #{closed_call.16} parent=0 // pred_check
    _
  $region15: #{closed_call.16} parent=0 // pred_check_branch
    %17 = sbr.rel (0) target = $region17
  $region16: #{closed_call.16} parent=0 // pred_region
    _
  $region17: #{closed_call.16} parent=0 // pred_fallthru
    _
  // Predicated region
  $region18: #{closed_call.16} parent=0 // pred_check
    _
  $region19: #{closed_call.16} parent=0 // pred_check_branch
    %19 = sbr.rel (0) target = $region21
  $region20: #{closed_call.16} parent=0 // pred_region
    _
  $region21: #{closed_call.16} parent=0 // pred_fallthru
    _
  %p21 = scmp.eq.s32.totalorder 0, 0
  // Predicated region
  $region22: #{closed_call.16} parent=0 // pred_check
    %p22 = pneg %p21
  $region23: #{closed_call.16} parent=0 // pred_check_branch
    %24 = sbr.rel (%p22) target = $region25
  $region24: #{closed_call.16} parent=0 // pred_region
    %v25 = vld [vmem:[%s0] sm:$0xf]
    %v26 = vld [vmem:[%s0 + $0x4] sm:$0xf]
    %v27 = vunpack.c.l.bf16 %v25
    %v28 = vunpack.c.l.bf16 %v26
    %v29 = vmul.f32 %v27, %v27
    %v30 = vmul.f32 %v28, %v28
    %vm31 = vcmask 261120
    %v32 = vsel %vm31, %v29, 0.0
    %33 = vadd.xlane.f32.xlu0 %v32
    %v34 = vpop.xlane.xlu0 %33
    %v35 = vsel %vm31, %v30, 0.0
    %36 = vadd.xlane.f32.xlu0 %v35
    %v37 = vpop.xlane.xlu0 %36
    %v38 = vrcp.pop 32.0
    %v39 = vmul.f32 32.0, %v38
    %v40 = vsub.f32 1.0, %v39
    %v41 = vmul.f32 %v38, %v40
    %v42 = vadd.f32 %v38, %v41
    %vm43 = vweird.f32 %v38
    %v44 = vsel %vm43, %v38, %v42
    %v45 = vmul.f32 %v34, %v44
    %v46 = vmul.f32 %v37, %v44
    %v47 = vadd.f32 %v45, 1e-06
    %v48 = vadd.f32 %v46, 1e-06
    %v49 = vrsqrt.pop %v47
    %v50 = vmul.f32 %v49, %v47
    %v51 = vmul.f32 %v50, %v49
    %v52 = vmul.f32 0.5, %v51
    %v53 = vsub.f32 1.5, %v52
    %v54 = vmul.f32 %v49, %v53
    %vm55 = vweird.f32 %v47
    %vm56 = vweird.f32 %v49
    %vm57 = vmor %vm55, %vm56
    %v58 = vsel %vm57, %v49, %v54
    %v59 = vrsqrt.pop %v48
    %v60 = vmul.f32 %v59, %v48
    %v61 = vmul.f32 %v60, %v59
    %v62 = vmul.f32 0.5, %v61
    %v63 = vsub.f32 1.5, %v62
    %v64 = vmul.f32 %v59, %v63
    %vm65 = vweird.f32 %v48
    %vm66 = vweird.f32 %v59
    %vm67 = vmor %vm65, %vm66
    %v68 = vsel %vm67, %v59, %v64
    %v69 = vmul.f32 %v27, %v58
    %v70 = vmul.f32 %v28, %v68
    %v71 = vld [vmem:[%s1] sm:$0x1]
    %v72 = vunpack.c.l.bf16 %v71
    %v73 = vperm.slane %v72, 0
    %v74 = vmul.f32 %v69, %v73
    %v75 = vmul.f32 %v70, %v73
    %v76 = vpack.c.bf16 %v74, %v74
    %v77 = vpack.c.bf16 %v75, %v75
    %vm78 = vcmask 257024
    %79 = vst.msk [vmem:[#allocation2] sm:$0xf] %vm78, %v76
    %80 = vst.msk [vmem:[#allocation2 + $0x4] sm:$0xf] %vm78, %v77
    %81 = vst.msk [vmem:[#allocation3] sm:$0xff] %vm31, 0.0
    %82 = vst.msk [vmem:[#allocation3 + $0x8] sm:$0xff] %vm31, 0.0
  $region25: #{closed_call.16} parent=0 // pred_fallthru
    _
  %v83 = vld [vmem:[#allocation2] sm:$0xf]
  %v84 = vld [vmem:[#allocation2 + $0x4] sm:$0xf]
  %v85 = vld [vmem:[%s2] sm:$0xf]
  %v86 = vld [vmem:[%s2 + $0x4] sm:$0xf]
  %v87 = vld [vmem:[%s2 + $0x8] sm:$0xf]
  %v88 = vld [vmem:[%s2 + $0xc] sm:$0xf]
  %v91 = vunpack.c.l.b16 %v83
  %v92 = vunpack.c.l.b16 %v84
  %v93 = vpack.c.b16 %v92, %v91
  %v98 = vunpack.c.l.b16 %v85
  %v99 = vunpack.c.l.b16 %v86
  %v100 = vunpack.c.l.b16 %v87
  %v101 = vunpack.c.l.b16 %v88
  %v102 = vpack.c.b16 %v99, %v98
  %v103 = vpack.c.b16 %v101, %v100
  %vm106 = vcmask 261120
  %v108 = vsel %vm106, %v93, 0
  %110 = vmatpush.bf16.msra.mxu0 0
  %111 = vmatpush.bf16.msra.mxu0 0
  %112 = vmatpush.bf16.msra.mxu0 0
  %113 = vmatpush.bf16.msra.mxu0 0
  %114 = vmatpush.bf16.msra.mxu0 0
  %115 = vmatpush.bf16.msra.mxu0 0
  %116 = vmatpush.bf16.msra.mxu0 %v103
  %117 = vmatpush.bf16.msra.mxu0 %v102
  %118 = vmatmul.bf16.gmra.mxu0 %v108
  %v119 = vpop.f32.mrf.mxu0
  %v120 = vadd.f32 0.0, %v119
  %v121 = vpop.f32.mrf.mxu0
  %v122 = vadd.f32 0.0, %v121
  %123 = vdwg.mxu0
  %v124 = vld [vmem:[%s3] sm:$0xf]
  %v125 = vld [vmem:[%s3 + $0x4] sm:$0xf]
  %v126 = vld [vmem:[%s3 + $0x8] sm:$0xf]
  %v127 = vld [vmem:[%s3 + $0xc] sm:$0xf]
  %v132 = vunpack.c.l.b16 %v124
  %v133 = vunpack.c.l.b16 %v125
  %v134 = vunpack.c.l.b16 %v126
  %v135 = vunpack.c.l.b16 %v127
  %v136 = vpack.c.b16 %v133, %v132
  %v137 = vpack.c.b16 %v135, %v134
  %140 = vmatpush.bf16.msra.mxu0 0
  %141 = vmatpush.bf16.msra.mxu0 0
  %142 = vmatpush.bf16.msra.mxu0 0
  %143 = vmatpush.bf16.msra.mxu0 0
  %144 = vmatpush.bf16.msra.mxu0 0
  %145 = vmatpush.bf16.msra.mxu0 0
  %146 = vmatpush.bf16.msra.mxu0 %v137
  %147 = vmatpush.bf16.msra.mxu0 %v136
  %148 = vmatmul.bf16.gmra.mxu0 %v108
  %v149 = vpop.f32.mrf.mxu0
  %v150 = vadd.f32 0.0, %v149
  %v151 = vpop.f32.mrf.mxu0
  %v152 = vadd.f32 0.0, %v151
  %153 = vdwg.mxu0
  %v154 = vxor.u32 %v120, 2147483648
  %v155 = vxor.u32 %v122, 2147483648
  %v156 = vmul.f32 %v154, 1.442695
  %v157 = vpow.pop %v156
  %v158 = vmul.f32 %v155, 1.442695
  %v159 = vpow.pop %v158
  %v160 = vadd.f32 %v157, 1.0
  %v161 = vadd.f32 %v159, 1.0
  %v162 = vrcp.pop %v160
  %v163 = vmul.f32 %v160, %v162
  %v164 = vsub.f32 1.0, %v163
  %v165 = vmul.f32 %v162, %v164
  %v166 = vadd.f32 %v162, %v165
  %vm167 = vweird.f32 %v160
  %vm168 = vweird.f32 %v162
  %vm169 = vmor %vm167, %vm168
  %v170 = vsel %vm169, %v162, %v166
  %v171 = vand.u32 2147483647, %v160
  %vm172 = vcmp.eq.f32.partialorder %v171, 8.507059e+37
  %v173 = vand.u32 %v160, 2147483648
  %v174 = vor.u32 1.1754944e-38, %v173
  %v175 = vsel %vm172, %v174, %v170
  %v176 = vmul.f32 1.0, %v175
  %v177 = vrcp.pop %v161
  %v178 = vmul.f32 %v161, %v177
  %v179 = vsub.f32 1.0, %v178
  %v180 = vmul.f32 %v177, %v179
  %v181 = vadd.f32 %v177, %v180
  %vm182 = vweird.f32 %v161
  %vm183 = vweird.f32 %v177
  %vm184 = vmor %vm182, %vm183
  %v185 = vsel %vm184, %v177, %v181
  %v186 = vand.u32 2147483647, %v161
  %vm187 = vcmp.eq.f32.partialorder %v186, 8.507059e+37
  %v188 = vand.u32 %v161, 2147483648
  %v189 = vor.u32 1.1754944e-38, %v188
  %v190 = vsel %vm187, %v189, %v185
  %v191 = vmul.f32 1.0, %v190
  %v192 = vmul.f32 %v120, %v176
  %v193 = vmul.f32 %v122, %v191
  %v194 = vmul.f32 %v192, %v150
  %v195 = vmul.f32 %v193, %v152
  %v196 = vpack.c.bf16 %v195, %v194
  %v197 = vld [vmem:[#allocation3] sm:$0xff]
  %v198 = vld [vmem:[#allocation3 + $0x8] sm:$0xff]
  %v199 = vld [vmem:[%s4] sm:$0xf]
  %v200 = vld [vmem:[%s4 + $0x4] sm:$0xf]
  %v201 = vld [vmem:[%s4 + $0x8] sm:$0xf]
  %v202 = vld [vmem:[%s4 + $0xc] sm:$0xf]
  %v203 = vld [vmem:[%s4 + $0x10] sm:$0xf]
  %v204 = vld [vmem:[%s4 + $0x14] sm:$0xf]
  %v205 = vld [vmem:[%s4 + $0x18] sm:$0xf]
  %v206 = vld [vmem:[%s4 + $0x1c] sm:$0xf]
  %v215 = vunpack.c.l.b16 %v199
  %v216 = vunpack.c.l.b16 %v200
  %v217 = vunpack.c.l.b16 %v201
  %v218 = vunpack.c.l.b16 %v202
  %v219 = vunpack.c.l.b16 %v203
  %v220 = vunpack.c.l.b16 %v204
  %v221 = vunpack.c.l.b16 %v205
  %v222 = vunpack.c.l.b16 %v206
  %v223 = vpack.c.b16 %v216, %v215
  %v224 = vpack.c.b16 %v218, %v217
  %v225 = vpack.c.b16 %v220, %v219
  %v226 = vpack.c.b16 %v222, %v221
  %vm231 = vcmask 523264
  %v233 = vsel %vm231, %v196, 0
  %235 = vmatpush.bf16.msra.mxu0 0
  %236 = vmatpush.bf16.msra.mxu0 0
  %237 = vmatpush.bf16.msra.mxu0 0
  %238 = vmatpush.bf16.msra.mxu0 0
  %239 = vmatpush.bf16.msra.mxu0 %v226
  %240 = vmatpush.bf16.msra.mxu0 %v225
  %241 = vmatpush.bf16.msra.mxu0 %v224
  %242 = vmatpush.bf16.msra.mxu0 %v223
  %243 = vmatmul.bf16.gmra.mxu0 %v233
  %v244 = vpop.f32.mrf.mxu0
  %v245 = vadd.f32 0.0, %v244
  %v246 = vpop.f32.mrf.mxu0
  %v247 = vadd.f32 0.0, %v246
  %248 = vdwg.mxu0
  %v249 = vadd.f32 %v197, %v245
  %v250 = vadd.f32 %v198, %v247
  %251 = vst.msk [vmem:[#allocation3] sm:$0xff] %vm106, %v249
  %252 = vst.msk [vmem:[#allocation3 + $0x8] sm:$0xff] %vm106, %v250
  // Predicated region
  $region26: #{closed_call.16} parent=0 // pred_check
    %p253 = pneg %p21
  $region27: #{closed_call.16} parent=0 // pred_check_branch
    %255 = sbr.rel (%p253) target = $region29
  $region28: #{closed_call.16} parent=0 // pred_region
    %v256 = vld [vmem:[#allocation3] sm:$0xff]
    %v257 = vld [vmem:[#allocation3 + $0x8] sm:$0xff]
    %v258 = vld [vmem:[%s0] sm:$0xf]
    %v259 = vld [vmem:[%s0 + $0x4] sm:$0xf]
    %v260 = vunpack.c.l.bf16 %v258
    %v261 = vunpack.c.l.bf16 %v259
    %v262 = vadd.f32 %v256, %v260
    %v263 = vadd.f32 %v257, %v261
    %v264 = vpack.c.bf16 %v262, %v262
    %v265 = vpack.c.bf16 %v263, %v263
    %vm266 = vcmask 257024
    %267 = vst.msk [vmem:[%s5] sm:$0xf] %vm266, %v264
    %268 = vst.msk [vmem:[%s5 + $0x4] sm:$0xf] %vm266, %v265
  $region29: #{closed_call.16} parent=0 // pred_fallthru
    _
  // Predicated region
  $region30: #{closed_call.16} parent=0 // pred_check
    _
  $region31: #{closed_call.16} parent=0 // pred_check_branch
    %270 = sbr.rel (0) target = $region33
  $region32: #{closed_call.16} parent=0 // pred_region
    _
  $region33: #{closed_call.16} parent=0 // pred_fallthru
    _
  // Predicated region
  $region34: #{closed_call.16} parent=0 // pred_check
    _
  $region35: #{closed_call.16} parent=0 // pred_check_branch
    %272 = sbr.rel (0) target = $region37
  $region36: #{closed_call.16} parent=0 // pred_region
    _
  $region37: #{closed_call.16} parent=0 // pred_fallthru
    _

// kernel: _lambda_.1
$region0: #{_lambda_.1}
  #allocation0 [shape = 'u32[]', space=smem, size = 0x4, offset = 0x4, fixed_abs, tag = 'smem constant byte address 0x4 - core index']
  #allocation1 [shape = 'u32[72,128]{1,0:T(1,128)}', space=vmem, size = 0x9000, scoped, tag = 'internal scratch']
  #allocation2 [shape = 'bf16[16,32]{1,0:T(8,128)(2,1)}', space=vmem, size = 0x1000, scoped, tag = 'scratch operand']
  %s0 = inlined_call_operand.vmem [shape: bf16[16,32], index: 0, kind: input, shape index: {}]
  %s1 = inlined_call_operand.vmem [shape: bf16[1,32], index: 1, kind: input, shape index: {}]
  %s2 = inlined_call_operand.vmem [shape: bf16[32,64], index: 2, kind: input, shape index: {}]
  %s3 = inlined_call_operand.hbm [shape: f32[16,64], index: 3, kind: output, shape index: {}]
  %s4 = sld [smem:[#allocation0]]
  $region26: #{_lambda_.1} parent=0
    _
  %s6 = ssub.s32 1, %s4
  %s7 = scalar_select 0, %s6, %s4
  $region1: #{_lambda_.1} parent=0
    #allocation3 [shape = 'u8[8192]{0}', space=vmem, size = 0x2000, scoped, tag = 'output window, operand 0, single buffered']
    #allocation4 [shape = 's32[1]{0}', space=sflag, size = 0x4, scoped, tag = 'scoped memory for _lambda_.1']
    %8 = vsyncpa [#allocation4], 0
    // Predicated region
    $region2: #{_lambda_.1} parent=1 // pred_check
      _
    $region3: #{_lambda_.1} parent=1 // pred_check_branch
      %10 = sbr.rel (0) target = $region5
    $region4: #{_lambda_.1} parent=1 // pred_region
      _
    $region5: #{_lambda_.1} parent=1 // pred_fallthru
      _
    // Predicated region
    $region6: #{_lambda_.1} parent=1 // pred_check
      _
    $region7: #{_lambda_.1} parent=1 // pred_check_branch
      %12 = sbr.rel (0) target = $region9
    $region8: #{_lambda_.1} parent=1 // pred_region
      _
    $region9: #{_lambda_.1} parent=1 // pred_fallthru
      _
    // Predicated region
    $region10: #{_lambda_.1} parent=1 // pred_check
      _
    $region11: #{_lambda_.1} parent=1 // pred_check_branch
      %14 = sbr.rel (0) target = $region13
    $region12: #{_lambda_.1} parent=1 // pred_region
      _
    $region13: #{_lambda_.1} parent=1 // pred_fallthru
      _
    %p16 = scmp.eq.s32.totalorder 0, 0
    // Predicated region
    $region14: #{_lambda_.1} parent=1 // pred_check
      %p17 = pneg %p16
    $region15: #{_lambda_.1} parent=1 // pred_check_branch
      %19 = sbr.rel (%p17) target = $region17
    $region16: #{_lambda_.1} parent=1 // pred_region
      %v20 = vld [vmem:[%s0] sm:$0xf]
      %v21 = vld [vmem:[%s0 + $0x4] sm:$0xf]
      %v22 = vunpack.c.l.bf16 %v20
      %v23 = vunpack.c.l.bf16 %v21
      %v24 = vmul.f32 %v22, %v22
      %v25 = vmul.f32 %v23, %v23
      %vm26 = vcmask 261120
      %v27 = vsel %vm26, %v24, 0.0
      %28 = vadd.xlane.f32.xlu0 %v27
      %v29 = vpop.xlane.xlu0 %28
      %v30 = vsel %vm26, %v25, 0.0
      %31 = vadd.xlane.f32.xlu0 %v30
      %v32 = vpop.xlane.xlu0 %31
      %v33 = vrcp.pop 32.0
      %v34 = vmul.f32 32.0, %v33
      %v35 = vsub.f32 1.0, %v34
      %v36 = vmul.f32 %v33, %v35
      %v37 = vadd.f32 %v33, %v36
      %vm38 = vweird.f32 %v33
      %v39 = vsel %vm38, %v33, %v37
      %v40 = vmul.f32 %v29, %v39
      %v41 = vmul.f32 %v32, %v39
      %v42 = vadd.f32 %v40, 1e-06
      %v43 = vadd.f32 %v41, 1e-06
      %v44 = vrsqrt.pop %v42
      %v45 = vmul.f32 %v44, %v42
      %v46 = vmul.f32 %v45, %v44
      %v47 = vmul.f32 0.5, %v46
      %v48 = vsub.f32 1.5, %v47
      %v49 = vmul.f32 %v44, %v48
      %vm50 = vweird.f32 %v42
      %vm51 = vweird.f32 %v44
      %vm52 = vmor %vm50, %vm51
      %v53 = vsel %vm52, %v44, %v49
      %v54 = vrsqrt.pop %v43
      %v55 = vmul.f32 %v54, %v43
      %v56 = vmul.f32 %v55, %v54
      %v57 = vmul.f32 0.5, %v56
      %v58 = vsub.f32 1.5, %v57
      %v59 = vmul.f32 %v54, %v58
      %vm60 = vweird.f32 %v43
      %vm61 = vweird.f32 %v54
      %vm62 = vmor %vm60, %vm61
      %v63 = vsel %vm62, %v54, %v59
      %v64 = vmul.f32 %v22, %v53
      %v65 = vmul.f32 %v23, %v63
      %v66 = vld [vmem:[%s1] sm:$0x1]
      %v67 = vunpack.c.l.bf16 %v66
      %v68 = vperm.slane %v67, 0
      %v69 = vmul.f32 %v64, %v68
      %v70 = vmul.f32 %v65, %v68
      %v71 = vpack.c.bf16 %v69, %v69
      %v72 = vpack.c.bf16 %v70, %v70
      %vm73 = vcmask 257024
      %74 = vst.msk [vmem:[#allocation2] sm:$0xf] %vm73, %v71
      %75 = vst.msk [vmem:[#allocation2 + $0x4] sm:$0xf] %vm73, %v72
    $region17: #{_lambda_.1} parent=1 // pred_fallthru
      _
    %v76 = vld [vmem:[#allocation2] sm:$0xf]
    %v77 = vld [vmem:[#allocation2 + $0x4] sm:$0xf]
    %v78 = vld [vmem:[%s2] sm:$0xf]
    %v79 = vld [vmem:[%s2 + $0x4] sm:$0xf]
    %v80 = vld [vmem:[%s2 + $0x8] sm:$0xf]
    %v81 = vld [vmem:[%s2 + $0xc] sm:$0xf]
    %v84 = vunpack.c.l.b16 %v76
    %v85 = vunpack.c.l.b16 %v77
    %v86 = vpack.c.b16 %v85, %v84
    %v91 = vunpack.c.l.b16 %v78
    %v92 = vunpack.c.l.b16 %v79
    %v93 = vunpack.c.l.b16 %v80
    %v94 = vunpack.c.l.b16 %v81
    %v95 = vpack.c.b16 %v92, %v91
    %v96 = vpack.c.b16 %v94, %v93
    %vm99 = vcmask 261120
    %v101 = vsel %vm99, %v86, 0
    %103 = vmatpush.bf16.msra.mxu0 0
    %104 = vmatpush.bf16.msra.mxu0 0
    %105 = vmatpush.bf16.msra.mxu0 0
    %106 = vmatpush.bf16.msra.mxu0 0
    %107 = vmatpush.bf16.msra.mxu0 0
    %108 = vmatpush.bf16.msra.mxu0 0
    %109 = vmatpush.bf16.msra.mxu0 %v96
    %110 = vmatpush.bf16.msra.mxu0 %v95
    %111 = vmatmul.bf16.gmra.mxu0 %v101
    %v112 = vpop.f32.mrf.mxu0
    %v113 = vadd.f32 0.0, %v112
    %v114 = vpop.f32.mrf.mxu0
    %v115 = vadd.f32 0.0, %v114
    %116 = vdwg.mxu0
    %vm117 = vcmask 523264
    %118 = vst.msk [vmem:[#allocation3] sm:$0xff] %vm117, %v113
    %119 = vst.msk [vmem:[#allocation3 + $0x8] sm:$0xff] %vm117, %v115
    // Predicated region
    $region18: #{_lambda_.1} parent=1 // pred_check
      _
    $region19: #{_lambda_.1} parent=1 // pred_check_branch
      %121 = sbr.rel (0) target = $region21
    $region20: #{_lambda_.1} parent=1 // pred_region
      %123 = vsyncadd [#allocation4], 0
      %s124 = sshll.u32 [#allocation3], 4
      %s125 = int_to_ptr.vmem [resolvable:$true] %s124
      %s126 = sshll.u32 %s3, 4
      %s127 = int_to_ptr.hbm [resolvable:$true] %s126
      %132 = dma.vmem_to_hbm [thread:$0]  %s125, 256, %s127, [#allocation4], 128, 128, 8
    $region21: #{_lambda_.1} parent=1 // pred_fallthru
      _
    // Predicated region
    $region22: #{_lambda_.1} parent=1 // pred_check
      _
    $region23: #{_lambda_.1} parent=1 // pred_check_branch
      %134 = sbr.rel (0) target = $region25
    $region24: #{_lambda_.1} parent=1 // pred_region
      %136 = dma.done [#allocation4], 256
    $region25: #{_lambda_.1} parent=1 // pred_fallthru
      _
    %137 = vsyncpa [#allocation4], 1

</llo_original>
